<compile_context>
chip_gen: v5e
topology: v5e:2x2
jax: 0.10.0
libtpu: 0.0.40
codegen_flags: <defaults>
</compile_context>

<pallas_src>
import functools
import math

import jax
import jax.numpy as jnp
from jax.experimental import pallas as pl
from jax.experimental.pallas import tpu as pltpu


_ISSUE_UNROLL = 8   # rows of DMA descriptors issued per unrolled loop step


# ---------------------------------------------------------------------------
# Device-dependent tuning
# ---------------------------------------------------------------------------

def _vmem_capacity_bytes():
    try:
        return int(pltpu.get_tpu_info().vmem_capacity_bytes)
    except Exception:
        return 64 * 1024 * 1024          # conservative (v7x-sized) fallback


def _gather_budgets():
    """(gather-scratch budget, vmem_limit_bytes), sized per TPU generation."""
    cap = _vmem_capacity_bytes()
    if cap >= 100 * 1024 * 1024:         # v5e / v6e: 128 MiB physical VMEM
        return 48 * 1024 * 1024, 96 * 1024 * 1024
    return 16 * 1024 * 1024, 32 * 1024 * 1024   # v7x: 64 MiB physical VMEM


def _num_core_split():
    """Outer 'parallel' grid extent: 2 on v7x (2 TCs/chip), else 1."""
    try:
        kind = jax.devices()[0].device_kind.lower()
    except Exception:
        return 1
    if "v7" in kind or "tpu7" in kind:
        return 2
    return 1


def _round_up(x, m):
    return ((x + m - 1) // m) * m


def _pick_tb(batch, row_bytes, n_streams, budget):
    """Largest batch tile (multiple of 8, <=1024) whose double-buffered
    gather scratch fits `budget` bytes."""
    tb = budget // (n_streams * 2 * row_bytes)
    tb = max(8, min(1024, (tb // 8) * 8))
    return min(tb, _round_up(batch, 8))


def _pad_ids(ids, b_pad):
    ids = ids.astype(jnp.int32)
    pad = b_pad - ids.shape[0]
    if pad:
        ids = jnp.concatenate([ids, jnp.zeros((pad,), jnp.int32)])
    return ids


# ---------------------------------------------------------------------------
# In-kernel helpers
# ---------------------------------------------------------------------------

def _issue_gather(streams, sems, slot, base, tb):
    """Issue one (1, row_width) row-gather DMA per stream per row of a tile.

    streams: sequence of (ids_smem_ref, table_hbm_ref, vmem_buf_ref); every
    buffer has shape (2, tb, row_width).  Stream `si`'s copies for this tile
    land in buffer `slot` and all signal sems[slot, si].  The loop is unrolled
    _ISSUE_UNROLL rows per iteration so descriptor pushes pack back-to-back
    against the vector-misc slot instead of per-row loop overhead.
    """
    n_iter = tb // _ISSUE_UNROLL   # tb is always a multiple of _ISSUE_UNROLL

    @pl.loop(0, n_iter)
    def _(it):
        r0 = pl.multiple_of(it * _ISSUE_UNROLL, _ISSUE_UNROLL)
        for u in range(_ISSUE_UNROLL):
            r = r0 + u
            for si, (ids, table, buf) in enumerate(streams):
                idx = ids[base + r]
                pltpu.make_async_copy(
                    table.at[pl.ds(idx, 1)],
                    buf.at[slot, pl.ds(r, 1)],
                    sems.at[slot, si],
                ).start()


def _wait_gather(streams, sems, slot):
    """One byte-counted wait per stream for the tile landing in `slot`.

    DMA semaphores count bytes: stream `si` issued tb copies of one
    (1, row_width) buffer row each, so a single wait whose descriptor covers
    the whole (tb, row_width) destination buffer decrements exactly the bytes
    issued.  Using the destination buffer itself as the descriptor ties the
    wait size to the issue size by construction (same rows, same dtype).
    """
    for si, (_, _, buf) in enumerate(streams):
        pltpu.make_async_copy(
            buf.at[slot], buf.at[slot], sems.at[slot, si]).wait()


def _rotate_score(head_ri, tail_ri, rel_cs, gamma, dim):
    """sigmoid(gamma - sum_D |h * r - t|) from concatenated (., 2D) tiles."""
    hr, hi = head_ri[:, :dim], head_ri[:, dim:]
    tr, ti = tail_ri[:, :dim], tail_ri[:, dim:]
    rel_real, rel_img = rel_cs[:, :dim], rel_cs[:, dim:]
    real_score = hr * rel_real - hi * rel_img - tr
    img_score = hr * rel_img + hi * rel_real - ti
    dist = jnp.sqrt(real_score * real_score + img_score * img_score)
    return jax.nn.sigmoid(gamma - jnp.sum(dist, axis=1, keepdims=True))


# ---------------------------------------------------------------------------
# Kernels
# ---------------------------------------------------------------------------

def _rotate_gather_kernel(
        head_ids, tail_ids, rel_ids,        # scalar prefetch (SMEM)
        ent_hbm, relcs_hbm,                 # concatenated tables in HBM (ANY)
        out_ref,                            # (tb, 1) output block
        h_buf, t_buf, r_buf,                # (2, tb, 2D) VMEM gather scratch
        sems,                               # DMA semaphores, shape (2, 3)
        *, tb, n_inner, gamma, dim):
    outer = pl.program_id(0)
    inner = pl.program_id(1)
    slot = inner % 2

    streams = (
        (head_ids, ent_hbm, h_buf),
        (tail_ids, ent_hbm, t_buf),
        (rel_ids, relcs_hbm, r_buf),
    )

    # Prime the pipeline with this core's first tile.
    @pl.when(inner == 0)
    def _():
        _issue_gather(streams, sems, 0, outer * n_inner * tb, tb)

    # Prefetch the next tile into the other slot; overlaps this tile's compute.
    @pl.when(inner + 1 < n_inner)
    def _():
        _issue_gather(streams, sems, 1 - slot,
                      (outer * n_inner + inner + 1) * tb, tb)

    _wait_gather(streams, sems, slot)

    out_ref[...] = _rotate_score(
        h_buf[slot].astype(jnp.float32),
        t_buf[slot].astype(jnp.float32),
        r_buf[slot].astype(jnp.float32),
        gamma, dim)


def _rotate_gather_fixed_rel_kernel(
        head_ids, tail_ids,                 # scalar prefetch (SMEM)
        ent_hbm,                            # concatenated entity table (ANY)
        relcs_row_ref,                      # (1, 2D) precomputed cos||sin row
        out_ref,                            # (tb, 1) output block
        h_buf, t_buf,                       # (2, tb, 2D) VMEM gather scratch
        sems,                               # DMA semaphores, shape (2, 2)
        *, tb, n_inner, gamma, dim):
    outer = pl.program_id(0)
    inner = pl.program_id(1)
    slot = inner % 2

    streams = (
        (head_ids, ent_hbm, h_buf),
        (tail_ids, ent_hbm, t_buf),
    )

    @pl.when(inner == 0)
    def _():
        _issue_gather(streams, sems, 0, outer * n_inner * tb, tb)

    @pl.when(inner + 1 < n_inner)
    def _():
        _issue_gather(streams, sems, 1 - slot,
                      (outer * n_inner + inner + 1) * tb, tb)

    _wait_gather(streams, sems, slot)

    out_ref[...] = _rotate_score(
        h_buf[slot].astype(jnp.float32),
        t_buf[slot].astype(jnp.float32),
        relcs_row_ref[...].astype(jnp.float32),
        gamma, dim)


# ---------------------------------------------------------------------------
# Host-side wrappers
# ---------------------------------------------------------------------------

def rotate_forward(ent_ri_table, rel_cs_table, head_ids, tail_ids, rel_ids,
                   *, gamma, tb=None):
    """Fused gather + RotatE score.

    ent_ri_table : (num_ent, 2D)  concat(real, img) entity embeddings.
    rel_cs_table : (num_rel, 2D)  concat(cos(rel/phase), sin(rel/phase)).
    ids          : (B,) int32.    Returns (B,) float32 scores.
    Precondition: every rel id < num_rel (mirrors the PyTorch model's quirk).
    """
    B = head_ids.shape[0]
    two_d = ent_ri_table.shape[1]
    assert rel_cs_table.shape[1] == two_d
    assert rel_cs_table.dtype == ent_ri_table.dtype
    dim = two_d // 2
    dtype = ent_ri_table.dtype
    row_bytes = two_d * dtype.itemsize

    budget, vmem_limit = _gather_budgets()
    if tb is None:
        tb = _pick_tb(B, row_bytes, n_streams=3, budget=budget)
    tb = max(8, (tb // 8) * 8)

    n_core_split = _num_core_split()
    n_tiles = pl.cdiv(B, tb)
    n_inner = pl.cdiv(n_tiles, n_core_split)
    b_pad = n_core_split * n_inner * tb

    head_ids = _pad_ids(head_ids, b_pad)
    tail_ids = _pad_ids(tail_ids, b_pad)
    rel_ids = _pad_ids(rel_ids, b_pad)

    kernel = functools.partial(
        _rotate_gather_kernel, tb=tb, n_inner=n_inner,
        gamma=float(gamma), dim=dim)

    out = pl.pallas_call(
        kernel,
        out_shape=jax.ShapeDtypeStruct((b_pad, 1), jnp.float32),
        grid_spec=pltpu.PrefetchScalarGridSpec(
            num_scalar_prefetch=3,
            grid=(n_core_split, n_inner),
            in_specs=[pl.BlockSpec(memory_space=pl.ANY),
                      pl.BlockSpec(memory_space=pl.ANY)],
            out_specs=pl.BlockSpec(
                (tb, 1), lambda o, i, h, t, r: (o * n_inner + i, 0)),
            scratch_shapes=[pltpu.VMEM((2, tb, two_d), dtype)
                            for _ in range(3)]
                           + [pltpu.SemaphoreType.DMA((2, 3))],
        ),
        compiler_params=pltpu.CompilerParams(
            dimension_semantics=("parallel", "arbitrary"),
            vmem_limit_bytes=vmem_limit),
    )(head_ids, tail_ids, rel_ids, ent_ri_table, rel_cs_table)
    return out[:B, 0]


def rotate_forward_fixed_rel(ent_ri_table, rel_cs_row, head_ids, tail_ids,
                             *, gamma, tb=None):
    """Fixed-relation fast path: one (1, 2D) cos||sin row shared by the batch
    (resident in VMEM via a constant-index BlockSpec)."""
    B = head_ids.shape[0]
    two_d = ent_ri_table.shape[1]
    assert rel_cs_row.shape == (1, two_d)
    dim = two_d // 2
    dtype = ent_ri_table.dtype
    row_bytes = two_d * dtype.itemsize

    budget, vmem_limit = _gather_budgets()
    if tb is None:
        tb = _pick_tb(B, row_bytes, n_streams=2, budget=budget)
    tb = max(8, (tb // 8) * 8)

    n_core_split = _num_core_split()
    n_tiles = pl.cdiv(B, tb)
    n_inner = pl.cdiv(n_tiles, n_core_split)
    b_pad = n_core_split * n_inner * tb

    head_ids = _pad_ids(head_ids, b_pad)
    tail_ids = _pad_ids(tail_ids, b_pad)

    kernel = functools.partial(
        _rotate_gather_fixed_rel_kernel, tb=tb, n_inner=n_inner,
        gamma=float(gamma), dim=dim)

    out = pl.pallas_call(
        kernel,
        out_shape=jax.ShapeDtypeStruct((b_pad, 1), jnp.float32),
        grid_spec=pltpu.PrefetchScalarGridSpec(
            num_scalar_prefetch=2,
            grid=(n_core_split, n_inner),
            in_specs=[pl.BlockSpec(memory_space=pl.ANY),
                      pl.BlockSpec((1, two_d), lambda o, i, h, t: (0, 0))],
            out_specs=pl.BlockSpec(
                (tb, 1), lambda o, i, h, t: (o * n_inner + i, 0)),
            scratch_shapes=[pltpu.VMEM((2, tb, two_d), dtype)
                            for _ in range(2)]
                           + [pltpu.SemaphoreType.DMA((2, 2))],
        ),
        compiler_params=pltpu.CompilerParams(
            dimension_semantics=("parallel", "arbitrary"),
            vmem_limit_bytes=vmem_limit),
    )(head_ids, tail_ids, ent_ri_table, rel_cs_row.astype(dtype))
    return out[:B, 0]


# ---------------------------------------------------------------------------
# Module stand-in (matches RotatEModel.__init__ / forward)
# ---------------------------------------------------------------------------

class RotatEParams:
    """Deterministic stand-in for RotatEModel (xavier_normal init).

    Kernel-facing tables are built once here (not per forward call):
      * ent_ri      : (num1, 2D) = concat(emb_ent_real, emb_ent_img)
      * rel_cos_sin : (num2, 2D) = concat(cos(emb_rel/phase), sin(emb_rel/phase))
    In a training loop these would be refreshed whenever the embeddings
    change (a cheap O(N*D) elementwise pass).
    """

    def __init__(self, key, num1, num2, output_dim, gamma):
        k1, k2, k3 = jax.random.split(key, 3)

        def xavier_normal(k, rows, cols):
            std = math.sqrt(2.0 / (rows + cols))
            return std * jax.random.normal(k, (rows, cols), dtype=jnp.float32)

        self.emb_ent_real = xavier_normal(k1, num1, output_dim)
        self.emb_ent_img = xavier_normal(k2, num1, output_dim)
        self.emb_rel = xavier_normal(k3, num2, output_dim)
        self.gamma = float(gamma)
        self.embedding_range = (gamma + 2.0) / output_dim
        self.phase = self.embedding_range / math.pi

        # Coalesced, kernel-facing tables in the embeddings' native dtype
        # (no per-call astype / full-table copies).
        self.ent_ri = jnp.concatenate(
            [self.emb_ent_real, self.emb_ent_img], axis=1)
        phase_rel = self.emb_rel / self.phase
        self.rel_cos_sin = jnp.concatenate(
            [jnp.cos(phase_rel), jnp.sin(phase_rel)], axis=1)
        # TODO(synk): BCELoss (`loss`) is not part of the forward pass and is
        # not implemented here.

    def forward(self, x, rel=None, tb=None):
        x = x.astype(jnp.int32)
        head_ids = x[:, 0]
        tail_ids = x[:, 1]
        if rel is None:
            # Matches the PyTorch forward: the relation row is indexed by the
            # tail *entity* id (caller must keep tail ids < num_relations).
            return rotate_forward(self.ent_ri, self.rel_cos_sin,
                                  head_ids, tail_ids, tail_ids,
                                  gamma=self.gamma, tb=tb)
        # Single shared relation row: cos/sin already precomputed at init.
        rel_cs_row = self.rel_cos_sin[rel][None, :]
        return rotate_forward_fixed_rel(self.ent_ri, rel_cs_row,
                                        head_ids, tail_ids,
                                        gamma=self.gamma, tb=tb)


def _reference_forward(params, x, rel=None):
    """Pure-JAX reference for correctness checking."""
    head_real = params.emb_ent_real[x[:, 0]]
    tail_real = params.emb_ent_real[x[:, 1]]
    head_img = params.emb_ent_img[x[:, 0]]
    tail_img = params.emb_ent_img[x[:, 1]]
    if rel is None:
        emb_rel = params.emb_rel[x[:, 1]]
    else:
        emb_rel = params.emb_rel[jnp.full((x.shape[0],), rel, jnp.int32)]
    phase_rel = emb_rel / params.phase
    rel_real = jnp.cos(phase_rel)
    rel_img = jnp.sin(phase_rel)
    real_score = head_real * rel_real - head_img * rel_img - tail_real
    img_score = head_real * rel_img + head_img * rel_real - tail_img
    score = jnp.sqrt(real_score ** 2 + img_score ** 2)
    score = params.gamma - score.sum(axis=1)
    return jax.nn.sigmoid(score)


if __name__ == "__main__":
    key = jax.random.PRNGKey(0)
    k_params, k_x1, k_x2 = jax.random.split(key, 3)

    num_entities = 64
    num_relations = 16
    output_dim = 128
    gamma = 12.0

    params = RotatEParams(k_params, num_entities, num_relations,
                          output_dim, gamma)

    # Case 1: rel=None path, auto tile size; non-multiple batch exercises the
    # id-padding path.  Ids drawn < num_relations so the tail-id relation
    # lookup stays in bounds (same precondition as the PyTorch model).
    x1 = jax.random.randint(k_x1, (20, 2), 0, num_relations, dtype=jnp.int32)
    out1 = jax.block_until_ready(params.forward(x1))
    ref1 = _reference_forward(params, x1)
    assert out1.shape == (20,)
    assert jnp.allclose(out1, ref1, atol=1e-4, rtol=1e-4), (out1, ref1)

    # Case 2: small explicit tile -> several inner tiles, exercising the
    # double-buffered gather pipeline and bulk per-stream waits across steps.
    x2 = jax.random.randint(k_x2, (40, 2), 0, num_relations, dtype=jnp.int32)
    out2 = jax.block_until_ready(params.forward(x2, tb=8))
    ref2 = _reference_forward(params, x2)
    assert jnp.allclose(out2, ref2, atol=1e-4, rtol=1e-4), (out2, ref2)

    # Case 3: fixed relation id (rel is not None) fast path.
    out3 = jax.block_until_ready(params.forward(x1, rel=3))
    ref3 = _reference_forward(params, x1, rel=3)
    assert jnp.allclose(out3, ref3, atol=1e-4, rtol=1e-4), (out3, ref3)

    print("KERNEL_OK")
</pallas_src>

<mosaic_0001>
module attributes {stable_mosaic.version = 11 : i64} {
  func.func @_rotate_gather_kernel(%arg0: i32, %arg1: i32, %arg2: memref<24xi32, #tpu.memory_space<smem>>, %arg3: memref<24xi32, #tpu.memory_space<smem>>, %arg4: memref<24xi32, #tpu.memory_space<smem>>, %arg5: memref<64x256xf32, #tpu.memory_space<any>>, %arg6: memref<16x256xf32, #tpu.memory_space<any>>, %arg7: memref<24x1xf32, #tpu.memory_space<vmem>>, %arg8: memref<2x24x256xf32, #tpu.memory_space<vmem>>, %arg9: memref<2x24x256xf32, #tpu.memory_space<vmem>>, %arg10: memref<2x24x256xf32, #tpu.memory_space<vmem>>, %arg11: memref<2x3x!tpu.dma_semaphore, #tpu.memory_space<semaphore_mem>>) attributes {dimension_semantics = [#tpu.dimension_semantics<parallel>, #tpu.dimension_semantics<arbitrary>], iteration_bounds = array<i64: 1, 1>, scalar_prefetch = 3 : i64, scratch_operands = 4 : i64, tpu.core_type = #tpu.core_type<tc>, window_params = [{}, {}, {transform_indices = @transform_2, window_bounds = array<i64: 24, 1>}]} {
    %c2_i32 = arith.constant 2 : i32
    %c0_i32 = arith.constant 0 : i32
    %0 = arith.cmpi eq, %c2_i32, %c0_i32 : i32
    %c1_i32 = arith.constant 1 : i32
    %1 = arith.select %0, %c1_i32, %c2_i32 : i32
    %2 = arith.remsi %arg1, %1 : i32
    %c0_i32_0 = arith.constant 0 : i32
    %3 = arith.cmpi ne, %2, %c0_i32_0 : i32
    %c0_i32_1 = arith.constant 0 : i32
    %4 = arith.cmpi slt, %2, %c0_i32_1 : i32
    %c0_i32_2 = arith.constant 0 : i32
    %5 = arith.cmpi slt, %1, %c0_i32_2 : i32
    %6 = arith.xori %4, %5 : i1
    %7 = arith.andi %6, %3 : i1
    %8 = arith.addi %2, %1 : i32
    %9 = arith.select %7, %8, %2 : i32
    %c0_i32_3 = arith.constant 0 : i32
    %10 = arith.cmpi eq, %arg1, %c0_i32_3 : i32
    %11 = arith.extui %10 : i1 to i32
    %c0_i32_4 = arith.constant 0 : i32
    %12 = arith.cmpi ne, %11, %c0_i32_4 : i32
    scf.if %12 {
      %c1_i32_32 = arith.constant 1 : i32
      %72 = arith.muli %arg0, %c1_i32_32 : i32
      %c24_i32 = arith.constant 24 : i32
      %73 = arith.muli %72, %c24_i32 : i32
      %c0_i32_33 = arith.constant 0 : i32
      %c3_i32 = arith.constant 3 : i32
      %74 = arith.addi %c0_i32_33, %c3_i32 : i32
      %c1_i32_34 = arith.constant 1 : i32
      scf.for %arg12 = %c0_i32_33 to %74 step %c1_i32_34  : i32 {
        %c1_i32_36 = arith.constant 1 : i32
        %75 = arith.muli %arg12, %c1_i32_36 : i32
        %c0_i32_37 = arith.constant 0 : i32
        %76 = arith.addi %c0_i32_37, %75 : i32
        %c8_i32 = arith.constant 8 : i32
        %77 = arith.muli %76, %c8_i32 : i32
        %78 = tpu.assume_multiple %77, 8 : i32
        %c0_i32_38 = arith.constant 0 : i32
        %79 = arith.addi %78, %c0_i32_38 : i32
        %80 = arith.addi %73, %79 : i32
        %81 = arith.index_cast %80 : i32 to index
        %82 = memref.load %arg2[%81] : memref<24xi32, #tpu.memory_space<smem>>
        %c0_i32_39 = arith.constant 0 : i32
        %c0_i32_40 = arith.constant 0 : i32
        %c0_i32_41 = arith.constant 0 : i32
        %c0_i32_42 = arith.constant 0 : i32
        %83 = tpu.memref_slice %arg5[%82, %c0_i32_42] : memref<64x256xf32, #tpu.memory_space<any>> -> memref<1x256xf32, #tpu.memory_space<any>>
        %c0_i32_43 = arith.constant 0 : i32
        %84 = tpu.memref_slice %arg8[%c0_i32_39, %79, %c0_i32_43] : memref<2x24x256xf32, #tpu.memory_space<vmem>> -> memref<1x1x256xf32, #tpu.memory_space<vmem>>
        %85 = tpu.memref_squeeze %84 : memref<1x1x256xf32, #tpu.memory_space<vmem>> -> memref<1x256xf32, #tpu.memory_space<vmem>>
        %86 = tpu.memref_slice %arg11[%c0_i32_40, %c0_i32_41] : memref<2x3x!tpu.dma_semaphore, #tpu.memory_space<semaphore_mem>> -> memref<1x1x!tpu.dma_semaphore, #tpu.memory_space<semaphore_mem>>
        %87 = tpu.memref_squeeze %86 : memref<1x1x!tpu.dma_semaphore, #tpu.memory_space<semaphore_mem>> -> memref<!tpu.dma_semaphore, #tpu.memory_space<semaphore_mem>>
        tpu.enqueue_dma source(%83 : memref<1x256xf32, #tpu.memory_space<any>>) target(%85 : memref<1x256xf32, #tpu.memory_space<vmem>>) target_semaphore(%87 : memref<!tpu.dma_semaphore, #tpu.memory_space<semaphore_mem>>)
        %88 = arith.addi %73, %79 : i32
        %89 = arith.index_cast %88 : i32 to index
        %90 = memref.load %arg3[%89] : memref<24xi32, #tpu.memory_space<smem>>
        %c0_i32_44 = arith.constant 0 : i32
        %c0_i32_45 = arith.constant 0 : i32
        %c1_i32_46 = arith.constant 1 : i32
        %c0_i32_47 = arith.constant 0 : i32
        %91 = tpu.memref_slice %arg5[%90, %c0_i32_47] : memref<64x256xf32, #tpu.memory_space<any>> -> memref<1x256xf32, #tpu.memory_space<any>>
        %c0_i32_48 = arith.constant 0 : i32
        %92 = tpu.memref_slice %arg9[%c0_i32_44, %79, %c0_i32_48] : memref<2x24x256xf32, #tpu.memory_space<vmem>> -> memref<1x1x256xf32, #tpu.memory_space<vmem>>
        %93 = tpu.memref_squeeze %92 : memref<1x1x256xf32, #tpu.memory_space<vmem>> -> memref<1x256xf32, #tpu.memory_space<vmem>>
        %94 = tpu.memref_slice %arg11[%c0_i32_45, %c1_i32_46] : memref<2x3x!tpu.dma_semaphore, #tpu.memory_space<semaphore_mem>> -> memref<1x1x!tpu.dma_semaphore, #tpu.memory_space<semaphore_mem>>
        %95 = tpu.memref_squeeze %94 : memref<1x1x!tpu.dma_semaphore, #tpu.memory_space<semaphore_mem>> -> memref<!tpu.dma_semaphore, #tpu.memory_space<semaphore_mem>>
        tpu.enqueue_dma source(%91 : memref<1x256xf32, #tpu.memory_space<any>>) target(%93 : memref<1x256xf32, #tpu.memory_space<vmem>>) target_semaphore(%95 : memref<!tpu.dma_semaphore, #tpu.memory_space<semaphore_mem>>)
        %96 = arith.addi %73, %79 : i32
        %97 = arith.index_cast %96 : i32 to index
        %98 = memref.load %arg4[%97] : memref<24xi32, #tpu.memory_space<smem>>
        %c0_i32_49 = arith.constant 0 : i32
        %c0_i32_50 = arith.constant 0 : i32
        %c2_i32_51 = arith.constant 2 : i32
        %c0_i32_52 = arith.constant 0 : i32
        %99 = tpu.memref_slice %arg6[%98, %c0_i32_52] : memref<16x256xf32, #tpu.memory_space<any>> -> memref<1x256xf32, #tpu.memory_space<any>>
        %c0_i32_53 = arith.constant 0 : i32
        %100 = tpu.memref_slice %arg10[%c0_i32_49, %79, %c0_i32_53] : memref<2x24x256xf32, #tpu.memory_space<vmem>> -> memref<1x1x256xf32, #tpu.memory_space<vmem>>
        %101 = tpu.memref_squeeze %100 : memref<1x1x256xf32, #tpu.memory_space<vmem>> -> memref<1x256xf32, #tpu.memory_space<vmem>>
        %102 = tpu.memref_slice %arg11[%c0_i32_50, %c2_i32_51] : memref<2x3x!tpu.dma_semaphore, #tpu.memory_space<semaphore_mem>> -> memref<1x1x!tpu.dma_semaphore, #tpu.memory_space<semaphore_mem>>
        %103 = tpu.memref_squeeze %102 : memref<1x1x!tpu.dma_semaphore, #tpu.memory_space<semaphore_mem>> -> memref<!tpu.dma_semaphore, #tpu.memory_space<semaphore_mem>>
        tpu.enqueue_dma source(%99 : memref<1x256xf32, #tpu.memory_space<any>>) target(%101 : memref<1x256xf32, #tpu.memory_space<vmem>>) target_semaphore(%103 : memref<!tpu.dma_semaphore, #tpu.memory_space<semaphore_mem>>)
        %c1_i32_54 = arith.constant 1 : i32
        %104 = arith.addi %78, %c1_i32_54 : i32
        %105 = arith.addi %73, %104 : i32
        %106 = arith.index_cast %105 : i32 to index
        %107 = memref.load %arg2[%106] : memref<24xi32, #tpu.memory_space<smem>>
        %c0_i32_55 = arith.constant 0 : i32
        %c0_i32_56 = arith.constant 0 : i32
        %c0_i32_57 = arith.constant 0 : i32
        %c0_i32_58 = arith.constant 0 : i32
        %108 = tpu.memref_slice %arg5[%107, %c0_i32_58] : memref<64x256xf32, #tpu.memory_space<any>> -> memref<1x256xf32, #tpu.memory_space<any>>
        %c0_i32_59 = arith.constant 0 : i32
        %109 = tpu.memref_slice %arg8[%c0_i32_55, %104, %c0_i32_59] : memref<2x24x256xf32, #tpu.memory_space<vmem>> -> memref<1x1x256xf32, #tpu.memory_space<vmem>>
        %110 = tpu.memref_squeeze %109 : memref<1x1x256xf32, #tpu.memory_space<vmem>> -> memref<1x256xf32, #tpu.memory_space<vmem>>
        %111 = tpu.memref_slice %arg11[%c0_i32_56, %c0_i32_57] : memref<2x3x!tpu.dma_semaphore, #tpu.memory_space<semaphore_mem>> -> memref<1x1x!tpu.dma_semaphore, #tpu.memory_space<semaphore_mem>>
        %112 = tpu.memref_squeeze %111 : memref<1x1x!tpu.dma_semaphore, #tpu.memory_space<semaphore_mem>> -> memref<!tpu.dma_semaphore, #tpu.memory_space<semaphore_mem>>
        tpu.enqueue_dma source(%108 : memref<1x256xf32, #tpu.memory_space<any>>) target(%110 : memref<1x256xf32, #tpu.memory_space<vmem>>) target_semaphore(%112 : memref<!tpu.dma_semaphore, #tpu.memory_space<semaphore_mem>>)
        %113 = arith.addi %73, %104 : i32
        %114 = arith.index_cast %113 : i32 to index
        %115 = memref.load %arg3[%114] : memref<24xi32, #tpu.memory_space<smem>>
        %c0_i32_60 = arith.constant 0 : i32
        %c0_i32_61 = arith.constant 0 : i32
        %c1_i32_62 = arith.constant 1 : i32
        %c0_i32_63 = arith.constant 0 : i32
        %116 = tpu.memref_slice %arg5[%115, %c0_i32_63] : memref<64x256xf32, #tpu.memory_space<any>> -> memref<1x256xf32, #tpu.memory_space<any>>
        %c0_i32_64 = arith.constant 0 : i32
        %117 = tpu.memref_slice %arg9[%c0_i32_60, %104, %c0_i32_64] : memref<2x24x256xf32, #tpu.memory_space<vmem>> -> memref<1x1x256xf32, #tpu.memory_space<vmem>>
        %118 = tpu.memref_squeeze %117 : memref<1x1x256xf32, #tpu.memory_space<vmem>> -> memref<1x256xf32, #tpu.memory_space<vmem>>
        %119 = tpu.memref_slice %arg11[%c0_i32_61, %c1_i32_62] : memref<2x3x!tpu.dma_semaphore, #tpu.memory_space<semaphore_mem>> -> memref<1x1x!tpu.dma_semaphore, #tpu.memory_space<semaphore_mem>>
        %120 = tpu.memref_squeeze %119 : memref<1x1x!tpu.dma_semaphore, #tpu.memory_space<semaphore_mem>> -> memref<!tpu.dma_semaphore, #tpu.memory_space<semaphore_mem>>
        tpu.enqueue_dma source(%116 : memref<1x256xf32, #tpu.memory_space<any>>) target(%118 : memref<1x256xf32, #tpu.memory_space<vmem>>) target_semaphore(%120 : memref<!tpu.dma_semaphore, #tpu.memory_space<semaphore_mem>>)
        %121 = arith.addi %73, %104 : i32
        %122 = arith.index_cast %121 : i32 to index
        %123 = memref.load %arg4[%122] : memref<24xi32, #tpu.memory_space<smem>>
        %c0_i32_65 = arith.constant 0 : i32
        %c0_i32_66 = arith.constant 0 : i32
        %c2_i32_67 = arith.constant 2 : i32
        %c0_i32_68 = arith.constant 0 : i32
        %124 = tpu.memref_slice %arg6[%123, %c0_i32_68] : memref<16x256xf32, #tpu.memory_space<any>> -> memref<1x256xf32, #tpu.memory_space<any>>
        %c0_i32_69 = arith.constant 0 : i32
        %125 = tpu.memref_slice %arg10[%c0_i32_65, %104, %c0_i32_69] : memref<2x24x256xf32, #tpu.memory_space<vmem>> -> memref<1x1x256xf32, #tpu.memory_space<vmem>>
        %126 = tpu.memref_squeeze %125 : memref<1x1x256xf32, #tpu.memory_space<vmem>> -> memref<1x256xf32, #tpu.memory_space<vmem>>
        %127 = tpu.memref_slice %arg11[%c0_i32_66, %c2_i32_67] : memref<2x3x!tpu.dma_semaphore, #tpu.memory_space<semaphore_mem>> -> memref<1x1x!tpu.dma_semaphore, #tpu.memory_space<semaphore_mem>>
        %128 = tpu.memref_squeeze %127 : memref<1x1x!tpu.dma_semaphore, #tpu.memory_space<semaphore_mem>> -> memref<!tpu.dma_semaphore, #tpu.memory_space<semaphore_mem>>
        tpu.enqueue_dma source(%124 : memref<1x256xf32, #tpu.memory_space<any>>) target(%126 : memref<1x256xf32, #tpu.memory_space<vmem>>) target_semaphore(%128 : memref<!tpu.dma_semaphore, #tpu.memory_space<semaphore_mem>>)
        %c2_i32_70 = arith.constant 2 : i32
        %129 = arith.addi %78, %c2_i32_70 : i32
        %130 = arith.addi %73, %129 : i32
        %131 = arith.index_cast %130 : i32 to index
        %132 = memref.load %arg2[%131] : memref<24xi32, #tpu.memory_space<smem>>
        %c0_i32_71 = arith.constant 0 : i32
        %c0_i32_72 = arith.constant 0 : i32
        %c0_i32_73 = arith.constant 0 : i32
        %c0_i32_74 = arith.constant 0 : i32
        %133 = tpu.memref_slice %arg5[%132, %c0_i32_74] : memref<64x256xf32, #tpu.memory_space<any>> -> memref<1x256xf32, #tpu.memory_space<any>>
        %c0_i32_75 = arith.constant 0 : i32
        %134 = tpu.memref_slice %arg8[%c0_i32_71, %129, %c0_i32_75] : memref<2x24x256xf32, #tpu.memory_space<vmem>> -> memref<1x1x256xf32, #tpu.memory_space<vmem>>
        %135 = tpu.memref_squeeze %134 : memref<1x1x256xf32, #tpu.memory_space<vmem>> -> memref<1x256xf32, #tpu.memory_space<vmem>>
        %136 = tpu.memref_slice %arg11[%c0_i32_72, %c0_i32_73] : memref<2x3x!tpu.dma_semaphore, #tpu.memory_space<semaphore_mem>> -> memref<1x1x!tpu.dma_semaphore, #tpu.memory_space<semaphore_mem>>
        %137 = tpu.memref_squeeze %136 : memref<1x1x!tpu.dma_semaphore, #tpu.memory_space<semaphore_mem>> -> memref<!tpu.dma_semaphore, #tpu.memory_space<semaphore_mem>>
        tpu.enqueue_dma source(%133 : memref<1x256xf32, #tpu.memory_space<any>>) target(%135 : memref<1x256xf32, #tpu.memory_space<vmem>>) target_semaphore(%137 : memref<!tpu.dma_semaphore, #tpu.memory_space<semaphore_mem>>)
        %138 = arith.addi %73, %129 : i32
        %139 = arith.index_cast %138 : i32 to index
        %140 = memref.load %arg3[%139] : memref<24xi32, #tpu.memory_space<smem>>
        %c0_i32_76 = arith.constant 0 : i32
        %c0_i32_77 = arith.constant 0 : i32
        %c1_i32_78 = arith.constant 1 : i32
        %c0_i32_79 = arith.constant 0 : i32
        %141 = tpu.memref_slice %arg5[%140, %c0_i32_79] : memref<64x256xf32, #tpu.memory_space<any>> -> memref<1x256xf32, #tpu.memory_space<any>>
        %c0_i32_80 = arith.constant 0 : i32
        %142 = tpu.memref_slice %arg9[%c0_i32_76, %129, %c0_i32_80] : memref<2x24x256xf32, #tpu.memory_space<vmem>> -> memref<1x1x256xf32, #tpu.memory_space<vmem>>
        %143 = tpu.memref_squeeze %142 : memref<1x1x256xf32, #tpu.memory_space<vmem>> -> memref<1x256xf32, #tpu.memory_space<vmem>>
        %144 = tpu.memref_slice %arg11[%c0_i32_77, %c1_i32_78] : memref<2x3x!tpu.dma_semaphore, #tpu.memory_space<semaphore_mem>> -> memref<1x1x!tpu.dma_semaphore, #tpu.memory_space<semaphore_mem>>
        %145 = tpu.memref_squeeze %144 : memref<1x1x!tpu.dma_semaphore, #tpu.memory_space<semaphore_mem>> -> memref<!tpu.dma_semaphore, #tpu.memory_space<semaphore_mem>>
        tpu.enqueue_dma source(%141 : memref<1x256xf32, #tpu.memory_space<any>>) target(%143 : memref<1x256xf32, #tpu.memory_space<vmem>>) target_semaphore(%145 : memref<!tpu.dma_semaphore, #tpu.memory_space<semaphore_mem>>)
        %146 = arith.addi %73, %129 : i32
        %147 = arith.index_cast %146 : i32 to index
        %148 = memref.load %arg4[%147] : memref<24xi32, #tpu.memory_space<smem>>
        %c0_i32_81 = arith.constant 0 : i32
        %c0_i32_82 = arith.constant 0 : i32
        %c2_i32_83 = arith.constant 2 : i32
        %c0_i32_84 = arith.constant 0 : i32
        %149 = tpu.memref_slice %arg6[%148, %c0_i32_84] : memref<16x256xf32, #tpu.memory_space<any>> -> memref<1x256xf32, #tpu.memory_space<any>>
        %c0_i32_85 = arith.constant 0 : i32
        %150 = tpu.memref_slice %arg10[%c0_i32_81, %129, %c0_i32_85] : memref<2x24x256xf32, #tpu.memory_space<vmem>> -> memref<1x1x256xf32, #tpu.memory_space<vmem>>
        %151 = tpu.memref_squeeze %150 : memref<1x1x256xf32, #tpu.memory_space<vmem>> -> memref<1x256xf32, #tpu.memory_space<vmem>>
        %152 = tpu.memref_slice %arg11[%c0_i32_82, %c2_i32_83] : memref<2x3x!tpu.dma_semaphore, #tpu.memory_space<semaphore_mem>> -> memref<1x1x!tpu.dma_semaphore, #tpu.memory_space<semaphore_mem>>
        %153 = tpu.memref_squeeze %152 : memref<1x1x!tpu.dma_semaphore, #tpu.memory_space<semaphore_mem>> -> memref<!tpu.dma_semaphore, #tpu.memory_space<semaphore_mem>>
        tpu.enqueue_dma source(%149 : memref<1x256xf32, #tpu.memory_space<any>>) target(%151 : memref<1x256xf32, #tpu.memory_space<vmem>>) target_semaphore(%153 : memref<!tpu.dma_semaphore, #tpu.memory_space<semaphore_mem>>)
        %c3_i32_86 = arith.constant 3 : i32
        %154 = arith.addi %78, %c3_i32_86 : i32
        %155 = arith.addi %73, %154 : i32
        %156 = arith.index_cast %155 : i32 to index
        %157 = memref.load %arg2[%156] : memref<24xi32, #tpu.memory_space<smem>>
        %c0_i32_87 = arith.constant 0 : i32
        %c0_i32_88 = arith.constant 0 : i32
        %c0_i32_89 = arith.constant 0 : i32
        %c0_i32_90 = arith.constant 0 : i32
        %158 = tpu.memref_slice %arg5[%157, %c0_i32_90] : memref<64x256xf32, #tpu.memory_space<any>> -> memref<1x256xf32, #tpu.memory_space<any>>
        %c0_i32_91 = arith.constant 0 : i32
        %159 = tpu.memref_slice %arg8[%c0_i32_87, %154, %c0_i32_91] : memref<2x24x256xf32, #tpu.memory_space<vmem>> -> memref<1x1x256xf32, #tpu.memory_space<vmem>>
        %160 = tpu.memref_squeeze %159 : memref<1x1x256xf32, #tpu.memory_space<vmem>> -> memref<1x256xf32, #tpu.memory_space<vmem>>
        %161 = tpu.memref_slice %arg11[%c0_i32_88, %c0_i32_89] : memref<2x3x!tpu.dma_semaphore, #tpu.memory_space<semaphore_mem>> -> memref<1x1x!tpu.dma_semaphore, #tpu.memory_space<semaphore_mem>>
        %162 = tpu.memref_squeeze %161 : memref<1x1x!tpu.dma_semaphore, #tpu.memory_space<semaphore_mem>> -> memref<!tpu.dma_semaphore, #tpu.memory_space<semaphore_mem>>
        tpu.enqueue_dma source(%158 : memref<1x256xf32, #tpu.memory_space<any>>) target(%160 : memref<1x256xf32, #tpu.memory_space<vmem>>) target_semaphore(%162 : memref<!tpu.dma_semaphore, #tpu.memory_space<semaphore_mem>>)
        %163 = arith.addi %73, %154 : i32
        %164 = arith.index_cast %163 : i32 to index
        %165 = memref.load %arg3[%164] : memref<24xi32, #tpu.memory_space<smem>>
        %c0_i32_92 = arith.constant 0 : i32
        %c0_i32_93 = arith.constant 0 : i32
        %c1_i32_94 = arith.constant 1 : i32
        %c0_i32_95 = arith.constant 0 : i32
        %166 = tpu.memref_slice %arg5[%165, %c0_i32_95] : memref<64x256xf32, #tpu.memory_space<any>> -> memref<1x256xf32, #tpu.memory_space<any>>
        %c0_i32_96 = arith.constant 0 : i32
        %167 = tpu.memref_slice %arg9[%c0_i32_92, %154, %c0_i32_96] : memref<2x24x256xf32, #tpu.memory_space<vmem>> -> memref<1x1x256xf32, #tpu.memory_space<vmem>>
        %168 = tpu.memref_squeeze %167 : memref<1x1x256xf32, #tpu.memory_space<vmem>> -> memref<1x256xf32, #tpu.memory_space<vmem>>
        %169 = tpu.memref_slice %arg11[%c0_i32_93, %c1_i32_94] : memref<2x3x!tpu.dma_semaphore, #tpu.memory_space<semaphore_mem>> -> memref<1x1x!tpu.dma_semaphore, #tpu.memory_space<semaphore_mem>>
        %170 = tpu.memref_squeeze %169 : memref<1x1x!tpu.dma_semaphore, #tpu.memory_space<semaphore_mem>> -> memref<!tpu.dma_semaphore, #tpu.memory_space<semaphore_mem>>
        tpu.enqueue_dma source(%166 : memref<1x256xf32, #tpu.memory_space<any>>) target(%168 : memref<1x256xf32, #tpu.memory_space<vmem>>) target_semaphore(%170 : memref<!tpu.dma_semaphore, #tpu.memory_space<semaphore_mem>>)
        %171 = arith.addi %73, %154 : i32
        %172 = arith.index_cast %171 : i32 to index
        %173 = memref.load %arg4[%172] : memref<24xi32, #tpu.memory_space<smem>>
        %c0_i32_97 = arith.constant 0 : i32
        %c0_i32_98 = arith.constant 0 : i32
        %c2_i32_99 = arith.constant 2 : i32
        %c0_i32_100 = arith.constant 0 : i32
        %174 = tpu.memref_slice %arg6[%173, %c0_i32_100] : memref<16x256xf32, #tpu.memory_space<any>> -> memref<1x256xf32, #tpu.memory_space<any>>
        %c0_i32_101 = arith.constant 0 : i32
        %175 = tpu.memref_slice %arg10[%c0_i32_97, %154, %c0_i32_101] : memref<2x24x256xf32, #tpu.memory_space<vmem>> -> memref<1x1x256xf32, #tpu.memory_space<vmem>>
        %176 = tpu.memref_squeeze %175 : memref<1x1x256xf32, #tpu.memory_space<vmem>> -> memref<1x256xf32, #tpu.memory_space<vmem>>
        %177 = tpu.memref_slice %arg11[%c0_i32_98, %c2_i32_99] : memref<2x3x!tpu.dma_semaphore, #tpu.memory_space<semaphore_mem>> -> memref<1x1x!tpu.dma_semaphore, #tpu.memory_space<semaphore_mem>>
        %178 = tpu.memref_squeeze %177 : memref<1x1x!tpu.dma_semaphore, #tpu.memory_space<semaphore_mem>> -> memref<!tpu.dma_semaphore, #tpu.memory_space<semaphore_mem>>
        tpu.enqueue_dma source(%174 : memref<1x256xf32, #tpu.memory_space<any>>) target(%176 : memref<1x256xf32, #tpu.memory_space<vmem>>) target_semaphore(%178 : memref<!tpu.dma_semaphore, #tpu.memory_space<semaphore_mem>>)
        %c4_i32 = arith.constant 4 : i32
        %179 = arith.addi %78, %c4_i32 : i32
        %180 = arith.addi %73, %179 : i32
        %181 = arith.index_cast %180 : i32 to index
        %182 = memref.load %arg2[%181] : memref<24xi32, #tpu.memory_space<smem>>
        %c0_i32_102 = arith.constant 0 : i32
        %c0_i32_103 = arith.constant 0 : i32
        %c0_i32_104 = arith.constant 0 : i32
        %c0_i32_105 = arith.constant 0 : i32
        %183 = tpu.memref_slice %arg5[%182, %c0_i32_105] : memref<64x256xf32, #tpu.memory_space<any>> -> memref<1x256xf32, #tpu.memory_space<any>>
        %c0_i32_106 = arith.constant 0 : i32
        %184 = tpu.memref_slice %arg8[%c0_i32_102, %179, %c0_i32_106] : memref<2x24x256xf32, #tpu.memory_space<vmem>> -> memref<1x1x256xf32, #tpu.memory_space<vmem>>
        %185 = tpu.memref_squeeze %184 : memref<1x1x256xf32, #tpu.memory_space<vmem>> -> memref<1x256xf32, #tpu.memory_space<vmem>>
        %186 = tpu.memref_slice %arg11[%c0_i32_103, %c0_i32_104] : memref<2x3x!tpu.dma_semaphore, #tpu.memory_space<semaphore_mem>> -> memref<1x1x!tpu.dma_semaphore, #tpu.memory_space<semaphore_mem>>
        %187 = tpu.memref_squeeze %186 : memref<1x1x!tpu.dma_semaphore, #tpu.memory_space<semaphore_mem>> -> memref<!tpu.dma_semaphore, #tpu.memory_space<semaphore_mem>>
        tpu.enqueue_dma source(%183 : memref<1x256xf32, #tpu.memory_space<any>>) target(%185 : memref<1x256xf32, #tpu.memory_space<vmem>>) target_semaphore(%187 : memref<!tpu.dma_semaphore, #tpu.memory_space<semaphore_mem>>)
        %188 = arith.addi %73, %179 : i32
        %189 = arith.index_cast %188 : i32 to index
        %190 = memref.load %arg3[%189] : memref<24xi32, #tpu.memory_space<smem>>
        %c0_i32_107 = arith.constant 0 : i32
        %c0_i32_108 = arith.constant 0 : i32
        %c1_i32_109 = arith.constant 1 : i32
        %c0_i32_110 = arith.constant 0 : i32
        %191 = tpu.memref_slice %arg5[%190, %c0_i32_110] : memref<64x256xf32, #tpu.memory_space<any>> -> memref<1x256xf32, #tpu.memory_space<any>>
        %c0_i32_111 = arith.constant 0 : i32
        %192 = tpu.memref_slice %arg9[%c0_i32_107, %179, %c0_i32_111] : memref<2x24x256xf32, #tpu.memory_space<vmem>> -> memref<1x1x256xf32, #tpu.memory_space<vmem>>
        %193 = tpu.memref_squeeze %192 : memref<1x1x256xf32, #tpu.memory_space<vmem>> -> memref<1x256xf32, #tpu.memory_space<vmem>>
        %194 = tpu.memref_slice %arg11[%c0_i32_108, %c1_i32_109] : memref<2x3x!tpu.dma_semaphore, #tpu.memory_space<semaphore_mem>> -> memref<1x1x!tpu.dma_semaphore, #tpu.memory_space<semaphore_mem>>
        %195 = tpu.memref_squeeze %194 : memref<1x1x!tpu.dma_semaphore, #tpu.memory_space<semaphore_mem>> -> memref<!tpu.dma_semaphore, #tpu.memory_space<semaphore_mem>>
        tpu.enqueue_dma source(%191 : memref<1x256xf32, #tpu.memory_space<any>>) target(%193 : memref<1x256xf32, #tpu.memory_space<vmem>>) target_semaphore(%195 : memref<!tpu.dma_semaphore, #tpu.memory_space<semaphore_mem>>)
        %196 = arith.addi %73, %179 : i32
        %197 = arith.index_cast %196 : i32 to index
        %198 = memref.load %arg4[%197] : memref<24xi32, #tpu.memory_space<smem>>
        %c0_i32_112 = arith.constant 0 : i32
        %c0_i32_113 = arith.constant 0 : i32
        %c2_i32_114 = arith.constant 2 : i32
        %c0_i32_115 = arith.constant 0 : i32
        %199 = tpu.memref_slice %arg6[%198, %c0_i32_115] : memref<16x256xf32, #tpu.memory_space<any>> -> memref<1x256xf32, #tpu.memory_space<any>>
        %c0_i32_116 = arith.constant 0 : i32
        %200 = tpu.memref_slice %arg10[%c0_i32_112, %179, %c0_i32_116] : memref<2x24x256xf32, #tpu.memory_space<vmem>> -> memref<1x1x256xf32, #tpu.memory_space<vmem>>
        %201 = tpu.memref_squeeze %200 : memref<1x1x256xf32, #tpu.memory_space<vmem>> -> memref<1x256xf32, #tpu.memory_space<vmem>>
        %202 = tpu.memref_slice %arg11[%c0_i32_113, %c2_i32_114] : memref<2x3x!tpu.dma_semaphore, #tpu.memory_space<semaphore_mem>> -> memref<1x1x!tpu.dma_semaphore, #tpu.memory_space<semaphore_mem>>
        %203 = tpu.memref_squeeze %202 : memref<1x1x!tpu.dma_semaphore, #tpu.memory_space<semaphore_mem>> -> memref<!tpu.dma_semaphore, #tpu.memory_space<semaphore_mem>>
        tpu.enqueue_dma source(%199 : memref<1x256xf32, #tpu.memory_space<any>>) target(%201 : memref<1x256xf32, #tpu.memory_space<vmem>>) target_semaphore(%203 : memref<!tpu.dma_semaphore, #tpu.memory_space<semaphore_mem>>)
        %c5_i32 = arith.constant 5 : i32
        %204 = arith.addi %78, %c5_i32 : i32
        %205 = arith.addi %73, %204 : i32
        %206 = arith.index_cast %205 : i32 to index
        %207 = memref.load %arg2[%206] : memref<24xi32, #tpu.memory_space<smem>>
        %c0_i32_117 = arith.constant 0 : i32
        %c0_i32_118 = arith.constant 0 : i32
        %c0_i32_119 = arith.constant 0 : i32
        %c0_i32_120 = arith.constant 0 : i32
        %208 = tpu.memref_slice %arg5[%207, %c0_i32_120] : memref<64x256xf32, #tpu.memory_space<any>> -> memref<1x256xf32, #tpu.memory_space<any>>
        %c0_i32_121 = arith.constant 0 : i32
        %209 = tpu.memref_slice %arg8[%c0_i32_117, %204, %c0_i32_121] : memref<2x24x256xf32, #tpu.memory_space<vmem>> -> memref<1x1x256xf32, #tpu.memory_space<vmem>>
        %210 = tpu.memref_squeeze %209 : memref<1x1x256xf32, #tpu.memory_space<vmem>> -> memref<1x256xf32, #tpu.memory_space<vmem>>
        %211 = tpu.memref_slice %arg11[%c0_i32_118, %c0_i32_119] : memref<2x3x!tpu.dma_semaphore, #tpu.memory_space<semaphore_mem>> -> memref<1x1x!tpu.dma_semaphore, #tpu.memory_space<semaphore_mem>>
        %212 = tpu.memref_squeeze %211 : memref<1x1x!tpu.dma_semaphore, #tpu.memory_space<semaphore_mem>> -> memref<!tpu.dma_semaphore, #tpu.memory_space<semaphore_mem>>
        tpu.enqueue_dma source(%208 : memref<1x256xf32, #tpu.memory_space<any>>) target(%210 : memref<1x256xf32, #tpu.memory_space<vmem>>) target_semaphore(%212 : memref<!tpu.dma_semaphore, #tpu.memory_space<semaphore_mem>>)
        %213 = arith.addi %73, %204 : i32
        %214 = arith.index_cast %213 : i32 to index
        %215 = memref.load %arg3[%214] : memref<24xi32, #tpu.memory_space<smem>>
        %c0_i32_122 = arith.constant 0 : i32
        %c0_i32_123 = arith.constant 0 : i32
        %c1_i32_124 = arith.constant 1 : i32
        %c0_i32_125 = arith.constant 0 : i32
        %216 = tpu.memref_slice %arg5[%215, %c0_i32_125] : memref<64x256xf32, #tpu.memory_space<any>> -> memref<1x256xf32, #tpu.memory_space<any>>
        %c0_i32_126 = arith.constant 0 : i32
        %217 = tpu.memref_slice %arg9[%c0_i32_122, %204, %c0_i32_126] : memref<2x24x256xf32, #tpu.memory_space<vmem>> -> memref<1x1x256xf32, #tpu.memory_space<vmem>>
        %218 = tpu.memref_squeeze %217 : memref<1x1x256xf32, #tpu.memory_space<vmem>> -> memref<1x256xf32, #tpu.memory_space<vmem>>
        %219 = tpu.memref_slice %arg11[%c0_i32_123, %c1_i32_124] : memref<2x3x!tpu.dma_semaphore, #tpu.memory_space<semaphore_mem>> -> memref<1x1x!tpu.dma_semaphore, #tpu.memory_space<semaphore_mem>>
        %220 = tpu.memref_squeeze %219 : memref<1x1x!tpu.dma_semaphore, #tpu.memory_space<semaphore_mem>> -> memref<!tpu.dma_semaphore, #tpu.memory_space<semaphore_mem>>
        tpu.enqueue_dma source(%216 : memref<1x256xf32, #tpu.memory_space<any>>) target(%218 : memref<1x256xf32, #tpu.memory_space<vmem>>) target_semaphore(%220 : memref<!tpu.dma_semaphore, #tpu.memory_space<semaphore_mem>>)
        %221 = arith.addi %73, %204 : i32
        %222 = arith.index_cast %221 : i32 to index
        %223 = memref.load %arg4[%222] : memref<24xi32, #tpu.memory_space<smem>>
        %c0_i32_127 = arith.constant 0 : i32
        %c0_i32_128 = arith.constant 0 : i32
        %c2_i32_129 = arith.constant 2 : i32
        %c0_i32_130 = arith.constant 0 : i32
        %224 = tpu.memref_slice %arg6[%223, %c0_i32_130] : memref<16x256xf32, #tpu.memory_space<any>> -> memref<1x256xf32, #tpu.memory_space<any>>
        %c0_i32_131 = arith.constant 0 : i32
        %225 = tpu.memref_slice %arg10[%c0_i32_127, %204, %c0_i32_131] : memref<2x24x256xf32, #tpu.memory_space<vmem>> -> memref<1x1x256xf32, #tpu.memory_space<vmem>>
        %226 = tpu.memref_squeeze %225 : memref<1x1x256xf32, #tpu.memory_space<vmem>> -> memref<1x256xf32, #tpu.memory_space<vmem>>
        %227 = tpu.memref_slice %arg11[%c0_i32_128, %c2_i32_129] : memref<2x3x!tpu.dma_semaphore, #tpu.memory_space<semaphore_mem>> -> memref<1x1x!tpu.dma_semaphore, #tpu.memory_space<semaphore_mem>>
        %228 = tpu.memref_squeeze %227 : memref<1x1x!tpu.dma_semaphore, #tpu.memory_space<semaphore_mem>> -> memref<!tpu.dma_semaphore, #tpu.memory_space<semaphore_mem>>
        tpu.enqueue_dma source(%224 : memref<1x256xf32, #tpu.memory_space<any>>) target(%226 : memref<1x256xf32, #tpu.memory_space<vmem>>) target_semaphore(%228 : memref<!tpu.dma_semaphore, #tpu.memory_space<semaphore_mem>>)
        %c6_i32 = arith.constant 6 : i32
        %229 = arith.addi %78, %c6_i32 : i32
        %230 = arith.addi %73, %229 : i32
        %231 = arith.index_cast %230 : i32 to index
        %232 = memref.load %arg2[%231] : memref<24xi32, #tpu.memory_space<smem>>
        %c0_i32_132 = arith.constant 0 : i32
        %c0_i32_133 = arith.constant 0 : i32
        %c0_i32_134 = arith.constant 0 : i32
        %c0_i32_135 = arith.constant 0 : i32
        %233 = tpu.memref_slice %arg5[%232, %c0_i32_135] : memref<64x256xf32, #tpu.memory_space<any>> -> memref<1x256xf32, #tpu.memory_space<any>>
        %c0_i32_136 = arith.constant 0 : i32
        %234 = tpu.memref_slice %arg8[%c0_i32_132, %229, %c0_i32_136] : memref<2x24x256xf32, #tpu.memory_space<vmem>> -> memref<1x1x256xf32, #tpu.memory_space<vmem>>
        %235 = tpu.memref_squeeze %234 : memref<1x1x256xf32, #tpu.memory_space<vmem>> -> memref<1x256xf32, #tpu.memory_space<vmem>>
        %236 = tpu.memref_slice %arg11[%c0_i32_133, %c0_i32_134] : memref<2x3x!tpu.dma_semaphore, #tpu.memory_space<semaphore_mem>> -> memref<1x1x!tpu.dma_semaphore, #tpu.memory_space<semaphore_mem>>
        %237 = tpu.memref_squeeze %236 : memref<1x1x!tpu.dma_semaphore, #tpu.memory_space<semaphore_mem>> -> memref<!tpu.dma_semaphore, #tpu.memory_space<semaphore_mem>>
        tpu.enqueue_dma source(%233 : memref<1x256xf32, #tpu.memory_space<any>>) target(%235 : memref<1x256xf32, #tpu.memory_space<vmem>>) target_semaphore(%237 : memref<!tpu.dma_semaphore, #tpu.memory_space<semaphore_mem>>)
        %238 = arith.addi %73, %229 : i32
        %239 = arith.index_cast %238 : i32 to index
        %240 = memref.load %arg3[%239] : memref<24xi32, #tpu.memory_space<smem>>
        %c0_i32_137 = arith.constant 0 : i32
        %c0_i32_138 = arith.constant 0 : i32
        %c1_i32_139 = arith.constant 1 : i32
        %c0_i32_140 = arith.constant 0 : i32
        %241 = tpu.memref_slice %arg5[%240, %c0_i32_140] : memref<64x256xf32, #tpu.memory_space<any>> -> memref<1x256xf32, #tpu.memory_space<any>>
        %c0_i32_141 = arith.constant 0 : i32
        %242 = tpu.memref_slice %arg9[%c0_i32_137, %229, %c0_i32_141] : memref<2x24x256xf32, #tpu.memory_space<vmem>> -> memref<1x1x256xf32, #tpu.memory_space<vmem>>
        %243 = tpu.memref_squeeze %242 : memref<1x1x256xf32, #tpu.memory_space<vmem>> -> memref<1x256xf32, #tpu.memory_space<vmem>>
        %244 = tpu.memref_slice %arg11[%c0_i32_138, %c1_i32_139] : memref<2x3x!tpu.dma_semaphore, #tpu.memory_space<semaphore_mem>> -> memref<1x1x!tpu.dma_semaphore, #tpu.memory_space<semaphore_mem>>
        %245 = tpu.memref_squeeze %244 : memref<1x1x!tpu.dma_semaphore, #tpu.memory_space<semaphore_mem>> -> memref<!tpu.dma_semaphore, #tpu.memory_space<semaphore_mem>>
        tpu.enqueue_dma source(%241 : memref<1x256xf32, #tpu.memory_space<any>>) target(%243 : memref<1x256xf32, #tpu.memory_space<vmem>>) target_semaphore(%245 : memref<!tpu.dma_semaphore, #tpu.memory_space<semaphore_mem>>)
        %246 = arith.addi %73, %229 : i32
        %247 = arith.index_cast %246 : i32 to index
        %248 = memref.load %arg4[%247] : memref<24xi32, #tpu.memory_space<smem>>
        %c0_i32_142 = arith.constant 0 : i32
        %c0_i32_143 = arith.constant 0 : i32
        %c2_i32_144 = arith.constant 2 : i32
        %c0_i32_145 = arith.constant 0 : i32
        %249 = tpu.memref_slice %arg6[%248, %c0_i32_145] : memref<16x256xf32, #tpu.memory_space<any>> -> memref<1x256xf32, #tpu.memory_space<any>>
        %c0_i32_146 = arith.constant 0 : i32
        %250 = tpu.memref_slice %arg10[%c0_i32_142, %229, %c0_i32_146] : memref<2x24x256xf32, #tpu.memory_space<vmem>> -> memref<1x1x256xf32, #tpu.memory_space<vmem>>
        %251 = tpu.memref_squeeze %250 : memref<1x1x256xf32, #tpu.memory_space<vmem>> -> memref<1x256xf32, #tpu.memory_space<vmem>>
        %252 = tpu.memref_slice %arg11[%c0_i32_143, %c2_i32_144] : memref<2x3x!tpu.dma_semaphore, #tpu.memory_space<semaphore_mem>> -> memref<1x1x!tpu.dma_semaphore, #tpu.memory_space<semaphore_mem>>
        %253 = tpu.memref_squeeze %252 : memref<1x1x!tpu.dma_semaphore, #tpu.memory_space<semaphore_mem>> -> memref<!tpu.dma_semaphore, #tpu.memory_space<semaphore_mem>>
        tpu.enqueue_dma source(%249 : memref<1x256xf32, #tpu.memory_space<any>>) target(%251 : memref<1x256xf32, #tpu.memory_space<vmem>>) target_semaphore(%253 : memref<!tpu.dma_semaphore, #tpu.memory_space<semaphore_mem>>)
        %c7_i32 = arith.constant 7 : i32
        %254 = arith.addi %78, %c7_i32 : i32
        %255 = arith.addi %73, %254 : i32
        %256 = arith.index_cast %255 : i32 to index
        %257 = memref.load %arg2[%256] : memref<24xi32, #tpu.memory_space<smem>>
        %c0_i32_147 = arith.constant 0 : i32
        %c0_i32_148 = arith.constant 0 : i32
        %c0_i32_149 = arith.constant 0 : i32
        %c0_i32_150 = arith.constant 0 : i32
        %258 = tpu.memref_slice %arg5[%257, %c0_i32_150] : memref<64x256xf32, #tpu.memory_space<any>> -> memref<1x256xf32, #tpu.memory_space<any>>
        %c0_i32_151 = arith.constant 0 : i32
        %259 = tpu.memref_slice %arg8[%c0_i32_147, %254, %c0_i32_151] : memref<2x24x256xf32, #tpu.memory_space<vmem>> -> memref<1x1x256xf32, #tpu.memory_space<vmem>>
        %260 = tpu.memref_squeeze %259 : memref<1x1x256xf32, #tpu.memory_space<vmem>> -> memref<1x256xf32, #tpu.memory_space<vmem>>
        %261 = tpu.memref_slice %arg11[%c0_i32_148, %c0_i32_149] : memref<2x3x!tpu.dma_semaphore, #tpu.memory_space<semaphore_mem>> -> memref<1x1x!tpu.dma_semaphore, #tpu.memory_space<semaphore_mem>>
        %262 = tpu.memref_squeeze %261 : memref<1x1x!tpu.dma_semaphore, #tpu.memory_space<semaphore_mem>> -> memref<!tpu.dma_semaphore, #tpu.memory_space<semaphore_mem>>
        tpu.enqueue_dma source(%258 : memref<1x256xf32, #tpu.memory_space<any>>) target(%260 : memref<1x256xf32, #tpu.memory_space<vmem>>) target_semaphore(%262 : memref<!tpu.dma_semaphore, #tpu.memory_space<semaphore_mem>>)
        %263 = arith.addi %73, %254 : i32
        %264 = arith.index_cast %263 : i32 to index
        %265 = memref.load %arg3[%264] : memref<24xi32, #tpu.memory_space<smem>>
        %c0_i32_152 = arith.constant 0 : i32
        %c0_i32_153 = arith.constant 0 : i32
        %c1_i32_154 = arith.constant 1 : i32
        %c0_i32_155 = arith.constant 0 : i32
        %266 = tpu.memref_slice %arg5[%265, %c0_i32_155] : memref<64x256xf32, #tpu.memory_space<any>> -> memref<1x256xf32, #tpu.memory_space<any>>
        %c0_i32_156 = arith.constant 0 : i32
        %267 = tpu.memref_slice %arg9[%c0_i32_152, %254, %c0_i32_156] : memref<2x24x256xf32, #tpu.memory_space<vmem>> -> memref<1x1x256xf32, #tpu.memory_space<vmem>>
        %268 = tpu.memref_squeeze %267 : memref<1x1x256xf32, #tpu.memory_space<vmem>> -> memref<1x256xf32, #tpu.memory_space<vmem>>
        %269 = tpu.memref_slice %arg11[%c0_i32_153, %c1_i32_154] : memref<2x3x!tpu.dma_semaphore, #tpu.memory_space<semaphore_mem>> -> memref<1x1x!tpu.dma_semaphore, #tpu.memory_space<semaphore_mem>>
        %270 = tpu.memref_squeeze %269 : memref<1x1x!tpu.dma_semaphore, #tpu.memory_space<semaphore_mem>> -> memref<!tpu.dma_semaphore, #tpu.memory_space<semaphore_mem>>
        tpu.enqueue_dma source(%266 : memref<1x256xf32, #tpu.memory_space<any>>) target(%268 : memref<1x256xf32, #tpu.memory_space<vmem>>) target_semaphore(%270 : memref<!tpu.dma_semaphore, #tpu.memory_space<semaphore_mem>>)
        %271 = arith.addi %73, %254 : i32
        %272 = arith.index_cast %271 : i32 to index
        %273 = memref.load %arg4[%272] : memref<24xi32, #tpu.memory_space<smem>>
        %c0_i32_157 = arith.constant 0 : i32
        %c0_i32_158 = arith.constant 0 : i32
        %c2_i32_159 = arith.constant 2 : i32
        %c0_i32_160 = arith.constant 0 : i32
        %274 = tpu.memref_slice %arg6[%273, %c0_i32_160] : memref<16x256xf32, #tpu.memory_space<any>> -> memref<1x256xf32, #tpu.memory_space<any>>
        %c0_i32_161 = arith.constant 0 : i32
        %275 = tpu.memref_slice %arg10[%c0_i32_157, %254, %c0_i32_161] : memref<2x24x256xf32, #tpu.memory_space<vmem>> -> memref<1x1x256xf32, #tpu.memory_space<vmem>>
        %276 = tpu.memref_squeeze %275 : memref<1x1x256xf32, #tpu.memory_space<vmem>> -> memref<1x256xf32, #tpu.memory_space<vmem>>
        %277 = tpu.memref_slice %arg11[%c0_i32_158, %c2_i32_159] : memref<2x3x!tpu.dma_semaphore, #tpu.memory_space<semaphore_mem>> -> memref<1x1x!tpu.dma_semaphore, #tpu.memory_space<semaphore_mem>>
        %278 = tpu.memref_squeeze %277 : memref<1x1x!tpu.dma_semaphore, #tpu.memory_space<semaphore_mem>> -> memref<!tpu.dma_semaphore, #tpu.memory_space<semaphore_mem>>
        tpu.enqueue_dma source(%274 : memref<1x256xf32, #tpu.memory_space<any>>) target(%276 : memref<1x256xf32, #tpu.memory_space<vmem>>) target_semaphore(%278 : memref<!tpu.dma_semaphore, #tpu.memory_space<semaphore_mem>>)
      }
      %c3_i32_35 = arith.constant 3 : i32
    } else {
    }
    %c1_i32_5 = arith.constant 1 : i32
    %13 = arith.addi %arg1, %c1_i32_5 : i32
    %c1_i32_6 = arith.constant 1 : i32
    %14 = arith.cmpi slt, %13, %c1_i32_6 : i32
    %15 = arith.extui %14 : i1 to i32
    %c0_i32_7 = arith.constant 0 : i32
    %16 = arith.cmpi ne, %15, %c0_i32_7 : i32
    scf.if %16 {
      %c1_i32_32 = arith.constant 1 : i32
      %72 = arith.subi %c1_i32_32, %9 : i32
      %c1_i32_33 = arith.constant 1 : i32
      %73 = arith.muli %arg0, %c1_i32_33 : i32
      %74 = arith.addi %73, %arg1 : i32
      %c1_i32_34 = arith.constant 1 : i32
      %75 = arith.addi %74, %c1_i32_34 : i32
      %c24_i32 = arith.constant 24 : i32
      %76 = arith.muli %75, %c24_i32 : i32
      %c0_i32_35 = arith.constant 0 : i32
      %c3_i32 = arith.constant 3 : i32
      %77 = arith.addi %c0_i32_35, %c3_i32 : i32
      %c1_i32_36 = arith.constant 1 : i32
      scf.for %arg12 = %c0_i32_35 to %77 step %c1_i32_36  : i32 {
        %c1_i32_38 = arith.constant 1 : i32
        %78 = arith.muli %arg12, %c1_i32_38 : i32
        %c0_i32_39 = arith.constant 0 : i32
        %79 = arith.addi %c0_i32_39, %78 : i32
        %c8_i32 = arith.constant 8 : i32
        %80 = arith.muli %79, %c8_i32 : i32
        %81 = tpu.assume_multiple %80, 8 : i32
        %c0_i32_40 = arith.constant 0 : i32
        %82 = arith.addi %81, %c0_i32_40 : i32
        %83 = arith.addi %76, %82 : i32
        %84 = arith.index_cast %83 : i32 to index
        %85 = memref.load %arg2[%84] : memref<24xi32, #tpu.memory_space<smem>>
        %c0_i32_41 = arith.constant 0 : i32
        %c0_i32_42 = arith.constant 0 : i32
        %86 = tpu.memref_slice %arg5[%85, %c0_i32_42] : memref<64x256xf32, #tpu.memory_space<any>> -> memref<1x256xf32, #tpu.memory_space<any>>
        %c0_i32_43 = arith.constant 0 : i32
        %87 = tpu.memref_slice %arg8[%72, %82, %c0_i32_43] : memref<2x24x256xf32, #tpu.memory_space<vmem>> -> memref<1x1x256xf32, #tpu.memory_space<vmem>>
        %88 = tpu.memref_squeeze %87 : memref<1x1x256xf32, #tpu.memory_space<vmem>> -> memref<1x256xf32, #tpu.memory_space<vmem>>
        %89 = tpu.memref_slice %arg11[%72, %c0_i32_41] : memref<2x3x!tpu.dma_semaphore, #tpu.memory_space<semaphore_mem>> -> memref<1x1x!tpu.dma_semaphore, #tpu.memory_space<semaphore_mem>>
        %90 = tpu.memref_squeeze %89 : memref<1x1x!tpu.dma_semaphore, #tpu.memory_space<semaphore_mem>> -> memref<!tpu.dma_semaphore, #tpu.memory_space<semaphore_mem>>
        tpu.enqueue_dma source(%86 : memref<1x256xf32, #tpu.memory_space<any>>) target(%88 : memref<1x256xf32, #tpu.memory_space<vmem>>) target_semaphore(%90 : memref<!tpu.dma_semaphore, #tpu.memory_space<semaphore_mem>>)
        %91 = arith.addi %76, %82 : i32
        %92 = arith.index_cast %91 : i32 to index
        %93 = memref.load %arg3[%92] : memref<24xi32, #tpu.memory_space<smem>>
        %c1_i32_44 = arith.constant 1 : i32
        %c0_i32_45 = arith.constant 0 : i32
        %94 = tpu.memref_slice %arg5[%93, %c0_i32_45] : memref<64x256xf32, #tpu.memory_space<any>> -> memref<1x256xf32, #tpu.memory_space<any>>
        %c0_i32_46 = arith.constant 0 : i32
        %95 = tpu.memref_slice %arg9[%72, %82, %c0_i32_46] : memref<2x24x256xf32, #tpu.memory_space<vmem>> -> memref<1x1x256xf32, #tpu.memory_space<vmem>>
        %96 = tpu.memref_squeeze %95 : memref<1x1x256xf32, #tpu.memory_space<vmem>> -> memref<1x256xf32, #tpu.memory_space<vmem>>
        %97 = tpu.memref_slice %arg11[%72, %c1_i32_44] : memref<2x3x!tpu.dma_semaphore, #tpu.memory_space<semaphore_mem>> -> memref<1x1x!tpu.dma_semaphore, #tpu.memory_space<semaphore_mem>>
        %98 = tpu.memref_squeeze %97 : memref<1x1x!tpu.dma_semaphore, #tpu.memory_space<semaphore_mem>> -> memref<!tpu.dma_semaphore, #tpu.memory_space<semaphore_mem>>
        tpu.enqueue_dma source(%94 : memref<1x256xf32, #tpu.memory_space<any>>) target(%96 : memref<1x256xf32, #tpu.memory_space<vmem>>) target_semaphore(%98 : memref<!tpu.dma_semaphore, #tpu.memory_space<semaphore_mem>>)
        %99 = arith.addi %76, %82 : i32
        %100 = arith.index_cast %99 : i32 to index
        %101 = memref.load %arg4[%100] : memref<24xi32, #tpu.memory_space<smem>>
        %c2_i32_47 = arith.constant 2 : i32
        %c0_i32_48 = arith.constant 0 : i32
        %102 = tpu.memref_slice %arg6[%101, %c0_i32_48] : memref<16x256xf32, #tpu.memory_space<any>> -> memref<1x256xf32, #tpu.memory_space<any>>
        %c0_i32_49 = arith.constant 0 : i32
        %103 = tpu.memref_slice %arg10[%72, %82, %c0_i32_49] : memref<2x24x256xf32, #tpu.memory_space<vmem>> -> memref<1x1x256xf32, #tpu.memory_space<vmem>>
        %104 = tpu.memref_squeeze %103 : memref<1x1x256xf32, #tpu.memory_space<vmem>> -> memref<1x256xf32, #tpu.memory_space<vmem>>
        %105 = tpu.memref_slice %arg11[%72, %c2_i32_47] : memref<2x3x!tpu.dma_semaphore, #tpu.memory_space<semaphore_mem>> -> memref<1x1x!tpu.dma_semaphore, #tpu.memory_space<semaphore_mem>>
        %106 = tpu.memref_squeeze %105 : memref<1x1x!tpu.dma_semaphore, #tpu.memory_space<semaphore_mem>> -> memref<!tpu.dma_semaphore, #tpu.memory_space<semaphore_mem>>
        tpu.enqueue_dma source(%102 : memref<1x256xf32, #tpu.memory_space<any>>) target(%104 : memref<1x256xf32, #tpu.memory_space<vmem>>) target_semaphore(%106 : memref<!tpu.dma_semaphore, #tpu.memory_space<semaphore_mem>>)
        %c1_i32_50 = arith.constant 1 : i32
        %107 = arith.addi %81, %c1_i32_50 : i32
        %108 = arith.addi %76, %107 : i32
        %109 = arith.index_cast %108 : i32 to index
        %110 = memref.load %arg2[%109] : memref<24xi32, #tpu.memory_space<smem>>
        %c0_i32_51 = arith.constant 0 : i32
        %c0_i32_52 = arith.constant 0 : i32
        %111 = tpu.memref_slice %arg5[%110, %c0_i32_52] : memref<64x256xf32, #tpu.memory_space<any>> -> memref<1x256xf32, #tpu.memory_space<any>>
        %c0_i32_53 = arith.constant 0 : i32
        %112 = tpu.memref_slice %arg8[%72, %107, %c0_i32_53] : memref<2x24x256xf32, #tpu.memory_space<vmem>> -> memref<1x1x256xf32, #tpu.memory_space<vmem>>
        %113 = tpu.memref_squeeze %112 : memref<1x1x256xf32, #tpu.memory_space<vmem>> -> memref<1x256xf32, #tpu.memory_space<vmem>>
        %114 = tpu.memref_slice %arg11[%72, %c0_i32_51] : memref<2x3x!tpu.dma_semaphore, #tpu.memory_space<semaphore_mem>> -> memref<1x1x!tpu.dma_semaphore, #tpu.memory_space<semaphore_mem>>
        %115 = tpu.memref_squeeze %114 : memref<1x1x!tpu.dma_semaphore, #tpu.memory_space<semaphore_mem>> -> memref<!tpu.dma_semaphore, #tpu.memory_space<semaphore_mem>>
        tpu.enqueue_dma source(%111 : memref<1x256xf32, #tpu.memory_space<any>>) target(%113 : memref<1x256xf32, #tpu.memory_space<vmem>>) target_semaphore(%115 : memref<!tpu.dma_semaphore, #tpu.memory_space<semaphore_mem>>)
        %116 = arith.addi %76, %107 : i32
        %117 = arith.index_cast %116 : i32 to index
        %118 = memref.load %arg3[%117] : memref<24xi32, #tpu.memory_space<smem>>
        %c1_i32_54 = arith.constant 1 : i32
        %c0_i32_55 = arith.constant 0 : i32
        %119 = tpu.memref_slice %arg5[%118, %c0_i32_55] : memref<64x256xf32, #tpu.memory_space<any>> -> memref<1x256xf32, #tpu.memory_space<any>>
        %c0_i32_56 = arith.constant 0 : i32
        %120 = tpu.memref_slice %arg9[%72, %107, %c0_i32_56] : memref<2x24x256xf32, #tpu.memory_space<vmem>> -> memref<1x1x256xf32, #tpu.memory_space<vmem>>
        %121 = tpu.memref_squeeze %120 : memref<1x1x256xf32, #tpu.memory_space<vmem>> -> memref<1x256xf32, #tpu.memory_space<vmem>>
        %122 = tpu.memref_slice %arg11[%72, %c1_i32_54] : memref<2x3x!tpu.dma_semaphore, #tpu.memory_space<semaphore_mem>> -> memref<1x1x!tpu.dma_semaphore, #tpu.memory_space<semaphore_mem>>
        %123 = tpu.memref_squeeze %122 : memref<1x1x!tpu.dma_semaphore, #tpu.memory_space<semaphore_mem>> -> memref<!tpu.dma_semaphore, #tpu.memory_space<semaphore_mem>>
        tpu.enqueue_dma source(%119 : memref<1x256xf32, #tpu.memory_space<any>>) target(%121 : memref<1x256xf32, #tpu.memory_space<vmem>>) target_semaphore(%123 : memref<!tpu.dma_semaphore, #tpu.memory_space<semaphore_mem>>)
        %124 = arith.addi %76, %107 : i32
        %125 = arith.index_cast %124 : i32 to index
        %126 = memref.load %arg4[%125] : memref<24xi32, #tpu.memory_space<smem>>
        %c2_i32_57 = arith.constant 2 : i32
        %c0_i32_58 = arith.constant 0 : i32
        %127 = tpu.memref_slice %arg6[%126, %c0_i32_58] : memref<16x256xf32, #tpu.memory_space<any>> -> memref<1x256xf32, #tpu.memory_space<any>>
        %c0_i32_59 = arith.constant 0 : i32
        %128 = tpu.memref_slice %arg10[%72, %107, %c0_i32_59] : memref<2x24x256xf32, #tpu.memory_space<vmem>> -> memref<1x1x256xf32, #tpu.memory_space<vmem>>
        %129 = tpu.memref_squeeze %128 : memref<1x1x256xf32, #tpu.memory_space<vmem>> -> memref<1x256xf32, #tpu.memory_space<vmem>>
        %130 = tpu.memref_slice %arg11[%72, %c2_i32_57] : memref<2x3x!tpu.dma_semaphore, #tpu.memory_space<semaphore_mem>> -> memref<1x1x!tpu.dma_semaphore, #tpu.memory_space<semaphore_mem>>
        %131 = tpu.memref_squeeze %130 : memref<1x1x!tpu.dma_semaphore, #tpu.memory_space<semaphore_mem>> -> memref<!tpu.dma_semaphore, #tpu.memory_space<semaphore_mem>>
        tpu.enqueue_dma source(%127 : memref<1x256xf32, #tpu.memory_space<any>>) target(%129 : memref<1x256xf32, #tpu.memory_space<vmem>>) target_semaphore(%131 : memref<!tpu.dma_semaphore, #tpu.memory_space<semaphore_mem>>)
        %c2_i32_60 = arith.constant 2 : i32
        %132 = arith.addi %81, %c2_i32_60 : i32
        %133 = arith.addi %76, %132 : i32
        %134 = arith.index_cast %133 : i32 to index
        %135 = memref.load %arg2[%134] : memref<24xi32, #tpu.memory_space<smem>>
        %c0_i32_61 = arith.constant 0 : i32
        %c0_i32_62 = arith.constant 0 : i32
        %136 = tpu.memref_slice %arg5[%135, %c0_i32_62] : memref<64x256xf32, #tpu.memory_space<any>> -> memref<1x256xf32, #tpu.memory_space<any>>
        %c0_i32_63 = arith.constant 0 : i32
        %137 = tpu.memref_slice %arg8[%72, %132, %c0_i32_63] : memref<2x24x256xf32, #tpu.memory_space<vmem>> -> memref<1x1x256xf32, #tpu.memory_space<vmem>>
        %138 = tpu.memref_squeeze %137 : memref<1x1x256xf32, #tpu.memory_space<vmem>> -> memref<1x256xf32, #tpu.memory_space<vmem>>
        %139 = tpu.memref_slice %arg11[%72, %c0_i32_61] : memref<2x3x!tpu.dma_semaphore, #tpu.memory_space<semaphore_mem>> -> memref<1x1x!tpu.dma_semaphore, #tpu.memory_space<semaphore_mem>>
        %140 = tpu.memref_squeeze %139 : memref<1x1x!tpu.dma_semaphore, #tpu.memory_space<semaphore_mem>> -> memref<!tpu.dma_semaphore, #tpu.memory_space<semaphore_mem>>
        tpu.enqueue_dma source(%136 : memref<1x256xf32, #tpu.memory_space<any>>) target(%138 : memref<1x256xf32, #tpu.memory_space<vmem>>) target_semaphore(%140 : memref<!tpu.dma_semaphore, #tpu.memory_space<semaphore_mem>>)
        %141 = arith.addi %76, %132 : i32
        %142 = arith.index_cast %141 : i32 to index
        %143 = memref.load %arg3[%142] : memref<24xi32, #tpu.memory_space<smem>>
        %c1_i32_64 = arith.constant 1 : i32
        %c0_i32_65 = arith.constant 0 : i32
        %144 = tpu.memref_slice %arg5[%143, %c0_i32_65] : memref<64x256xf32, #tpu.memory_space<any>> -> memref<1x256xf32, #tpu.memory_space<any>>
        %c0_i32_66 = arith.constant 0 : i32
        %145 = tpu.memref_slice %arg9[%72, %132, %c0_i32_66] : memref<2x24x256xf32, #tpu.memory_space<vmem>> -> memref<1x1x256xf32, #tpu.memory_space<vmem>>
        %146 = tpu.memref_squeeze %145 : memref<1x1x256xf32, #tpu.memory_space<vmem>> -> memref<1x256xf32, #tpu.memory_space<vmem>>
        %147 = tpu.memref_slice %arg11[%72, %c1_i32_64] : memref<2x3x!tpu.dma_semaphore, #tpu.memory_space<semaphore_mem>> -> memref<1x1x!tpu.dma_semaphore, #tpu.memory_space<semaphore_mem>>
        %148 = tpu.memref_squeeze %147 : memref<1x1x!tpu.dma_semaphore, #tpu.memory_space<semaphore_mem>> -> memref<!tpu.dma_semaphore, #tpu.memory_space<semaphore_mem>>
        tpu.enqueue_dma source(%144 : memref<1x256xf32, #tpu.memory_space<any>>) target(%146 : memref<1x256xf32, #tpu.memory_space<vmem>>) target_semaphore(%148 : memref<!tpu.dma_semaphore, #tpu.memory_space<semaphore_mem>>)
        %149 = arith.addi %76, %132 : i32
        %150 = arith.index_cast %149 : i32 to index
        %151 = memref.load %arg4[%150] : memref<24xi32, #tpu.memory_space<smem>>
        %c2_i32_67 = arith.constant 2 : i32
        %c0_i32_68 = arith.constant 0 : i32
        %152 = tpu.memref_slice %arg6[%151, %c0_i32_68] : memref<16x256xf32, #tpu.memory_space<any>> -> memref<1x256xf32, #tpu.memory_space<any>>
        %c0_i32_69 = arith.constant 0 : i32
        %153 = tpu.memref_slice %arg10[%72, %132, %c0_i32_69] : memref<2x24x256xf32, #tpu.memory_space<vmem>> -> memref<1x1x256xf32, #tpu.memory_space<vmem>>
        %154 = tpu.memref_squeeze %153 : memref<1x1x256xf32, #tpu.memory_space<vmem>> -> memref<1x256xf32, #tpu.memory_space<vmem>>
        %155 = tpu.memref_slice %arg11[%72, %c2_i32_67] : memref<2x3x!tpu.dma_semaphore, #tpu.memory_space<semaphore_mem>> -> memref<1x1x!tpu.dma_semaphore, #tpu.memory_space<semaphore_mem>>
        %156 = tpu.memref_squeeze %155 : memref<1x1x!tpu.dma_semaphore, #tpu.memory_space<semaphore_mem>> -> memref<!tpu.dma_semaphore, #tpu.memory_space<semaphore_mem>>
        tpu.enqueue_dma source(%152 : memref<1x256xf32, #tpu.memory_space<any>>) target(%154 : memref<1x256xf32, #tpu.memory_space<vmem>>) target_semaphore(%156 : memref<!tpu.dma_semaphore, #tpu.memory_space<semaphore_mem>>)
        %c3_i32_70 = arith.constant 3 : i32
        %157 = arith.addi %81, %c3_i32_70 : i32
        %158 = arith.addi %76, %157 : i32
        %159 = arith.index_cast %158 : i32 to index
        %160 = memref.load %arg2[%159] : memref<24xi32, #tpu.memory_space<smem>>
        %c0_i32_71 = arith.constant 0 : i32
        %c0_i32_72 = arith.constant 0 : i32
        %161 = tpu.memref_slice %arg5[%160, %c0_i32_72] : memref<64x256xf32, #tpu.memory_space<any>> -> memref<1x256xf32, #tpu.memory_space<any>>
        %c0_i32_73 = arith.constant 0 : i32
        %162 = tpu.memref_slice %arg8[%72, %157, %c0_i32_73] : memref<2x24x256xf32, #tpu.memory_space<vmem>> -> memref<1x1x256xf32, #tpu.memory_space<vmem>>
        %163 = tpu.memref_squeeze %162 : memref<1x1x256xf32, #tpu.memory_space<vmem>> -> memref<1x256xf32, #tpu.memory_space<vmem>>
        %164 = tpu.memref_slice %arg11[%72, %c0_i32_71] : memref<2x3x!tpu.dma_semaphore, #tpu.memory_space<semaphore_mem>> -> memref<1x1x!tpu.dma_semaphore, #tpu.memory_space<semaphore_mem>>
        %165 = tpu.memref_squeeze %164 : memref<1x1x!tpu.dma_semaphore, #tpu.memory_space<semaphore_mem>> -> memref<!tpu.dma_semaphore, #tpu.memory_space<semaphore_mem>>
        tpu.enqueue_dma source(%161 : memref<1x256xf32, #tpu.memory_space<any>>) target(%163 : memref<1x256xf32, #tpu.memory_space<vmem>>) target_semaphore(%165 : memref<!tpu.dma_semaphore, #tpu.memory_space<semaphore_mem>>)
        %166 = arith.addi %76, %157 : i32
        %167 = arith.index_cast %166 : i32 to index
        %168 = memref.load %arg3[%167] : memref<24xi32, #tpu.memory_space<smem>>
        %c1_i32_74 = arith.constant 1 : i32
        %c0_i32_75 = arith.constant 0 : i32
        %169 = tpu.memref_slice %arg5[%168, %c0_i32_75] : memref<64x256xf32, #tpu.memory_space<any>> -> memref<1x256xf32, #tpu.memory_space<any>>
        %c0_i32_76 = arith.constant 0 : i32
        %170 = tpu.memref_slice %arg9[%72, %157, %c0_i32_76] : memref<2x24x256xf32, #tpu.memory_space<vmem>> -> memref<1x1x256xf32, #tpu.memory_space<vmem>>
        %171 = tpu.memref_squeeze %170 : memref<1x1x256xf32, #tpu.memory_space<vmem>> -> memref<1x256xf32, #tpu.memory_space<vmem>>
        %172 = tpu.memref_slice %arg11[%72, %c1_i32_74] : memref<2x3x!tpu.dma_semaphore, #tpu.memory_space<semaphore_mem>> -> memref<1x1x!tpu.dma_semaphore, #tpu.memory_space<semaphore_mem>>
        %173 = tpu.memref_squeeze %172 : memref<1x1x!tpu.dma_semaphore, #tpu.memory_space<semaphore_mem>> -> memref<!tpu.dma_semaphore, #tpu.memory_space<semaphore_mem>>
        tpu.enqueue_dma source(%169 : memref<1x256xf32, #tpu.memory_space<any>>) target(%171 : memref<1x256xf32, #tpu.memory_space<vmem>>) target_semaphore(%173 : memref<!tpu.dma_semaphore, #tpu.memory_space<semaphore_mem>>)
        %174 = arith.addi %76, %157 : i32
        %175 = arith.index_cast %174 : i32 to index
        %176 = memref.load %arg4[%175] : memref<24xi32, #tpu.memory_space<smem>>
        %c2_i32_77 = arith.constant 2 : i32
        %c0_i32_78 = arith.constant 0 : i32
        %177 = tpu.memref_slice %arg6[%176, %c0_i32_78] : memref<16x256xf32, #tpu.memory_space<any>> -> memref<1x256xf32, #tpu.memory_space<any>>
        %c0_i32_79 = arith.constant 0 : i32
        %178 = tpu.memref_slice %arg10[%72, %157, %c0_i32_79] : memref<2x24x256xf32, #tpu.memory_space<vmem>> -> memref<1x1x256xf32, #tpu.memory_space<vmem>>
        %179 = tpu.memref_squeeze %178 : memref<1x1x256xf32, #tpu.memory_space<vmem>> -> memref<1x256xf32, #tpu.memory_space<vmem>>
        %180 = tpu.memref_slice %arg11[%72, %c2_i32_77] : memref<2x3x!tpu.dma_semaphore, #tpu.memory_space<semaphore_mem>> -> memref<1x1x!tpu.dma_semaphore, #tpu.memory_space<semaphore_mem>>
        %181 = tpu.memref_squeeze %180 : memref<1x1x!tpu.dma_semaphore, #tpu.memory_space<semaphore_mem>> -> memref<!tpu.dma_semaphore, #tpu.memory_space<semaphore_mem>>
        tpu.enqueue_dma source(%177 : memref<1x256xf32, #tpu.memory_space<any>>) target(%179 : memref<1x256xf32, #tpu.memory_space<vmem>>) target_semaphore(%181 : memref<!tpu.dma_semaphore, #tpu.memory_space<semaphore_mem>>)
        %c4_i32 = arith.constant 4 : i32
        %182 = arith.addi %81, %c4_i32 : i32
        %183 = arith.addi %76, %182 : i32
        %184 = arith.index_cast %183 : i32 to index
        %185 = memref.load %arg2[%184] : memref<24xi32, #tpu.memory_space<smem>>
        %c0_i32_80 = arith.constant 0 : i32
        %c0_i32_81 = arith.constant 0 : i32
        %186 = tpu.memref_slice %arg5[%185, %c0_i32_81] : memref<64x256xf32, #tpu.memory_space<any>> -> memref<1x256xf32, #tpu.memory_space<any>>
        %c0_i32_82 = arith.constant 0 : i32
        %187 = tpu.memref_slice %arg8[%72, %182, %c0_i32_82] : memref<2x24x256xf32, #tpu.memory_space<vmem>> -> memref<1x1x256xf32, #tpu.memory_space<vmem>>
        %188 = tpu.memref_squeeze %187 : memref<1x1x256xf32, #tpu.memory_space<vmem>> -> memref<1x256xf32, #tpu.memory_space<vmem>>
        %189 = tpu.memref_slice %arg11[%72, %c0_i32_80] : memref<2x3x!tpu.dma_semaphore, #tpu.memory_space<semaphore_mem>> -> memref<1x1x!tpu.dma_semaphore, #tpu.memory_space<semaphore_mem>>
        %190 = tpu.memref_squeeze %189 : memref<1x1x!tpu.dma_semaphore, #tpu.memory_space<semaphore_mem>> -> memref<!tpu.dma_semaphore, #tpu.memory_space<semaphore_mem>>
        tpu.enqueue_dma source(%186 : memref<1x256xf32, #tpu.memory_space<any>>) target(%188 : memref<1x256xf32, #tpu.memory_space<vmem>>) target_semaphore(%190 : memref<!tpu.dma_semaphore, #tpu.memory_space<semaphore_mem>>)
        %191 = arith.addi %76, %182 : i32
        %192 = arith.index_cast %191 : i32 to index
        %193 = memref.load %arg3[%192] : memref<24xi32, #tpu.memory_space<smem>>
        %c1_i32_83 = arith.constant 1 : i32
        %c0_i32_84 = arith.constant 0 : i32
        %194 = tpu.memref_slice %arg5[%193, %c0_i32_84] : memref<64x256xf32, #tpu.memory_space<any>> -> memref<1x256xf32, #tpu.memory_space<any>>
        %c0_i32_85 = arith.constant 0 : i32
        %195 = tpu.memref_slice %arg9[%72, %182, %c0_i32_85] : memref<2x24x256xf32, #tpu.memory_space<vmem>> -> memref<1x1x256xf32, #tpu.memory_space<vmem>>
        %196 = tpu.memref_squeeze %195 : memref<1x1x256xf32, #tpu.memory_space<vmem>> -> memref<1x256xf32, #tpu.memory_space<vmem>>
        %197 = tpu.memref_slice %arg11[%72, %c1_i32_83] : memref<2x3x!tpu.dma_semaphore, #tpu.memory_space<semaphore_mem>> -> memref<1x1x!tpu.dma_semaphore, #tpu.memory_space<semaphore_mem>>
        %198 = tpu.memref_squeeze %197 : memref<1x1x!tpu.dma_semaphore, #tpu.memory_space<semaphore_mem>> -> memref<!tpu.dma_semaphore, #tpu.memory_space<semaphore_mem>>
        tpu.enqueue_dma source(%194 : memref<1x256xf32, #tpu.memory_space<any>>) target(%196 : memref<1x256xf32, #tpu.memory_space<vmem>>) target_semaphore(%198 : memref<!tpu.dma_semaphore, #tpu.memory_space<semaphore_mem>>)
        %199 = arith.addi %76, %182 : i32
        %200 = arith.index_cast %199 : i32 to index
        %201 = memref.load %arg4[%200] : memref<24xi32, #tpu.memory_space<smem>>
        %c2_i32_86 = arith.constant 2 : i32
        %c0_i32_87 = arith.constant 0 : i32
        %202 = tpu.memref_slice %arg6[%201, %c0_i32_87] : memref<16x256xf32, #tpu.memory_space<any>> -> memref<1x256xf32, #tpu.memory_space<any>>
        %c0_i32_88 = arith.constant 0 : i32
        %203 = tpu.memref_slice %arg10[%72, %182, %c0_i32_88] : memref<2x24x256xf32, #tpu.memory_space<vmem>> -> memref<1x1x256xf32, #tpu.memory_space<vmem>>
        %204 = tpu.memref_squeeze %203 : memref<1x1x256xf32, #tpu.memory_space<vmem>> -> memref<1x256xf32, #tpu.memory_space<vmem>>
        %205 = tpu.memref_slice %arg11[%72, %c2_i32_86] : memref<2x3x!tpu.dma_semaphore, #tpu.memory_space<semaphore_mem>> -> memref<1x1x!tpu.dma_semaphore, #tpu.memory_space<semaphore_mem>>
        %206 = tpu.memref_squeeze %205 : memref<1x1x!tpu.dma_semaphore, #tpu.memory_space<semaphore_mem>> -> memref<!tpu.dma_semaphore, #tpu.memory_space<semaphore_mem>>
        tpu.enqueue_dma source(%202 : memref<1x256xf32, #tpu.memory_space<any>>) target(%204 : memref<1x256xf32, #tpu.memory_space<vmem>>) target_semaphore(%206 : memref<!tpu.dma_semaphore, #tpu.memory_space<semaphore_mem>>)
        %c5_i32 = arith.constant 5 : i32
        %207 = arith.addi %81, %c5_i32 : i32
        %208 = arith.addi %76, %207 : i32
        %209 = arith.index_cast %208 : i32 to index
        %210 = memref.load %arg2[%209] : memref<24xi32, #tpu.memory_space<smem>>
        %c0_i32_89 = arith.constant 0 : i32
        %c0_i32_90 = arith.constant 0 : i32
        %211 = tpu.memref_slice %arg5[%210, %c0_i32_90] : memref<64x256xf32, #tpu.memory_space<any>> -> memref<1x256xf32, #tpu.memory_space<any>>
        %c0_i32_91 = arith.constant 0 : i32
        %212 = tpu.memref_slice %arg8[%72, %207, %c0_i32_91] : memref<2x24x256xf32, #tpu.memory_space<vmem>> -> memref<1x1x256xf32, #tpu.memory_space<vmem>>
        %213 = tpu.memref_squeeze %212 : memref<1x1x256xf32, #tpu.memory_space<vmem>> -> memref<1x256xf32, #tpu.memory_space<vmem>>
        %214 = tpu.memref_slice %arg11[%72, %c0_i32_89] : memref<2x3x!tpu.dma_semaphore, #tpu.memory_space<semaphore_mem>> -> memref<1x1x!tpu.dma_semaphore, #tpu.memory_space<semaphore_mem>>
        %215 = tpu.memref_squeeze %214 : memref<1x1x!tpu.dma_semaphore, #tpu.memory_space<semaphore_mem>> -> memref<!tpu.dma_semaphore, #tpu.memory_space<semaphore_mem>>
        tpu.enqueue_dma source(%211 : memref<1x256xf32, #tpu.memory_space<any>>) target(%213 : memref<1x256xf32, #tpu.memory_space<vmem>>) target_semaphore(%215 : memref<!tpu.dma_semaphore, #tpu.memory_space<semaphore_mem>>)
        %216 = arith.addi %76, %207 : i32
        %217 = arith.index_cast %216 : i32 to index
        %218 = memref.load %arg3[%217] : memref<24xi32, #tpu.memory_space<smem>>
        %c1_i32_92 = arith.constant 1 : i32
        %c0_i32_93 = arith.constant 0 : i32
        %219 = tpu.memref_slice %arg5[%218, %c0_i32_93] : memref<64x256xf32, #tpu.memory_space<any>> -> memref<1x256xf32, #tpu.memory_space<any>>
        %c0_i32_94 = arith.constant 0 : i32
        %220 = tpu.memref_slice %arg9[%72, %207, %c0_i32_94] : memref<2x24x256xf32, #tpu.memory_space<vmem>> -> memref<1x1x256xf32, #tpu.memory_space<vmem>>
        %221 = tpu.memref_squeeze %220 : memref<1x1x256xf32, #tpu.memory_space<vmem>> -> memref<1x256xf32, #tpu.memory_space<vmem>>
        %222 = tpu.memref_slice %arg11[%72, %c1_i32_92] : memref<2x3x!tpu.dma_semaphore, #tpu.memory_space<semaphore_mem>> -> memref<1x1x!tpu.dma_semaphore, #tpu.memory_space<semaphore_mem>>
        %223 = tpu.memref_squeeze %222 : memref<1x1x!tpu.dma_semaphore, #tpu.memory_space<semaphore_mem>> -> memref<!tpu.dma_semaphore, #tpu.memory_space<semaphore_mem>>
        tpu.enqueue_dma source(%219 : memref<1x256xf32, #tpu.memory_space<any>>) target(%221 : memref<1x256xf32, #tpu.memory_space<vmem>>) target_semaphore(%223 : memref<!tpu.dma_semaphore, #tpu.memory_space<semaphore_mem>>)
        %224 = arith.addi %76, %207 : i32
        %225 = arith.index_cast %224 : i32 to index
        %226 = memref.load %arg4[%225] : memref<24xi32, #tpu.memory_space<smem>>
        %c2_i32_95 = arith.constant 2 : i32
        %c0_i32_96 = arith.constant 0 : i32
        %227 = tpu.memref_slice %arg6[%226, %c0_i32_96] : memref<16x256xf32, #tpu.memory_space<any>> -> memref<1x256xf32, #tpu.memory_space<any>>
        %c0_i32_97 = arith.constant 0 : i32
        %228 = tpu.memref_slice %arg10[%72, %207, %c0_i32_97] : memref<2x24x256xf32, #tpu.memory_space<vmem>> -> memref<1x1x256xf32, #tpu.memory_space<vmem>>
        %229 = tpu.memref_squeeze %228 : memref<1x1x256xf32, #tpu.memory_space<vmem>> -> memref<1x256xf32, #tpu.memory_space<vmem>>
        %230 = tpu.memref_slice %arg11[%72, %c2_i32_95] : memref<2x3x!tpu.dma_semaphore, #tpu.memory_space<semaphore_mem>> -> memref<1x1x!tpu.dma_semaphore, #tpu.memory_space<semaphore_mem>>
        %231 = tpu.memref_squeeze %230 : memref<1x1x!tpu.dma_semaphore, #tpu.memory_space<semaphore_mem>> -> memref<!tpu.dma_semaphore, #tpu.memory_space<semaphore_mem>>
        tpu.enqueue_dma source(%227 : memref<1x256xf32, #tpu.memory_space<any>>) target(%229 : memref<1x256xf32, #tpu.memory_space<vmem>>) target_semaphore(%231 : memref<!tpu.dma_semaphore, #tpu.memory_space<semaphore_mem>>)
        %c6_i32 = arith.constant 6 : i32
        %232 = arith.addi %81, %c6_i32 : i32
        %233 = arith.addi %76, %232 : i32
        %234 = arith.index_cast %233 : i32 to index
        %235 = memref.load %arg2[%234] : memref<24xi32, #tpu.memory_space<smem>>
        %c0_i32_98 = arith.constant 0 : i32
        %c0_i32_99 = arith.constant 0 : i32
        %236 = tpu.memref_slice %arg5[%235, %c0_i32_99] : memref<64x256xf32, #tpu.memory_space<any>> -> memref<1x256xf32, #tpu.memory_space<any>>
        %c0_i32_100 = arith.constant 0 : i32
        %237 = tpu.memref_slice %arg8[%72, %232, %c0_i32_100] : memref<2x24x256xf32, #tpu.memory_space<vmem>> -> memref<1x1x256xf32, #tpu.memory_space<vmem>>
        %238 = tpu.memref_squeeze %237 : memref<1x1x256xf32, #tpu.memory_space<vmem>> -> memref<1x256xf32, #tpu.memory_space<vmem>>
        %239 = tpu.memref_slice %arg11[%72, %c0_i32_98] : memref<2x3x!tpu.dma_semaphore, #tpu.memory_space<semaphore_mem>> -> memref<1x1x!tpu.dma_semaphore, #tpu.memory_space<semaphore_mem>>
        %240 = tpu.memref_squeeze %239 : memref<1x1x!tpu.dma_semaphore, #tpu.memory_space<semaphore_mem>> -> memref<!tpu.dma_semaphore, #tpu.memory_space<semaphore_mem>>
        tpu.enqueue_dma source(%236 : memref<1x256xf32, #tpu.memory_space<any>>) target(%238 : memref<1x256xf32, #tpu.memory_space<vmem>>) target_semaphore(%240 : memref<!tpu.dma_semaphore, #tpu.memory_space<semaphore_mem>>)
        %241 = arith.addi %76, %232 : i32
        %242 = arith.index_cast %241 : i32 to index
        %243 = memref.load %arg3[%242] : memref<24xi32, #tpu.memory_space<smem>>
        %c1_i32_101 = arith.constant 1 : i32
        %c0_i32_102 = arith.constant 0 : i32
        %244 = tpu.memref_slice %arg5[%243, %c0_i32_102] : memref<64x256xf32, #tpu.memory_space<any>> -> memref<1x256xf32, #tpu.memory_space<any>>
        %c0_i32_103 = arith.constant 0 : i32
        %245 = tpu.memref_slice %arg9[%72, %232, %c0_i32_103] : memref<2x24x256xf32, #tpu.memory_space<vmem>> -> memref<1x1x256xf32, #tpu.memory_space<vmem>>
        %246 = tpu.memref_squeeze %245 : memref<1x1x256xf32, #tpu.memory_space<vmem>> -> memref<1x256xf32, #tpu.memory_space<vmem>>
        %247 = tpu.memref_slice %arg11[%72, %c1_i32_101] : memref<2x3x!tpu.dma_semaphore, #tpu.memory_space<semaphore_mem>> -> memref<1x1x!tpu.dma_semaphore, #tpu.memory_space<semaphore_mem>>
        %248 = tpu.memref_squeeze %247 : memref<1x1x!tpu.dma_semaphore, #tpu.memory_space<semaphore_mem>> -> memref<!tpu.dma_semaphore, #tpu.memory_space<semaphore_mem>>
        tpu.enqueue_dma source(%244 : memref<1x256xf32, #tpu.memory_space<any>>) target(%246 : memref<1x256xf32, #tpu.memory_space<vmem>>) target_semaphore(%248 : memref<!tpu.dma_semaphore, #tpu.memory_space<semaphore_mem>>)
        %249 = arith.addi %76, %232 : i32
        %250 = arith.index_cast %249 : i32 to index
        %251 = memref.load %arg4[%250] : memref<24xi32, #tpu.memory_space<smem>>
        %c2_i32_104 = arith.constant 2 : i32
        %c0_i32_105 = arith.constant 0 : i32
        %252 = tpu.memref_slice %arg6[%251, %c0_i32_105] : memref<16x256xf32, #tpu.memory_space<any>> -> memref<1x256xf32, #tpu.memory_space<any>>
        %c0_i32_106 = arith.constant 0 : i32
        %253 = tpu.memref_slice %arg10[%72, %232, %c0_i32_106] : memref<2x24x256xf32, #tpu.memory_space<vmem>> -> memref<1x1x256xf32, #tpu.memory_space<vmem>>
        %254 = tpu.memref_squeeze %253 : memref<1x1x256xf32, #tpu.memory_space<vmem>> -> memref<1x256xf32, #tpu.memory_space<vmem>>
        %255 = tpu.memref_slice %arg11[%72, %c2_i32_104] : memref<2x3x!tpu.dma_semaphore, #tpu.memory_space<semaphore_mem>> -> memref<1x1x!tpu.dma_semaphore, #tpu.memory_space<semaphore_mem>>
        %256 = tpu.memref_squeeze %255 : memref<1x1x!tpu.dma_semaphore, #tpu.memory_space<semaphore_mem>> -> memref<!tpu.dma_semaphore, #tpu.memory_space<semaphore_mem>>
        tpu.enqueue_dma source(%252 : memref<1x256xf32, #tpu.memory_space<any>>) target(%254 : memref<1x256xf32, #tpu.memory_space<vmem>>) target_semaphore(%256 : memref<!tpu.dma_semaphore, #tpu.memory_space<semaphore_mem>>)
        %c7_i32 = arith.constant 7 : i32
        %257 = arith.addi %81, %c7_i32 : i32
        %258 = arith.addi %76, %257 : i32
        %259 = arith.index_cast %258 : i32 to index
        %260 = memref.load %arg2[%259] : memref<24xi32, #tpu.memory_space<smem>>
        %c0_i32_107 = arith.constant 0 : i32
        %c0_i32_108 = arith.constant 0 : i32
        %261 = tpu.memref_slice %arg5[%260, %c0_i32_108] : memref<64x256xf32, #tpu.memory_space<any>> -> memref<1x256xf32, #tpu.memory_space<any>>
        %c0_i32_109 = arith.constant 0 : i32
        %262 = tpu.memref_slice %arg8[%72, %257, %c0_i32_109] : memref<2x24x256xf32, #tpu.memory_space<vmem>> -> memref<1x1x256xf32, #tpu.memory_space<vmem>>
        %263 = tpu.memref_squeeze %262 : memref<1x1x256xf32, #tpu.memory_space<vmem>> -> memref<1x256xf32, #tpu.memory_space<vmem>>
        %264 = tpu.memref_slice %arg11[%72, %c0_i32_107] : memref<2x3x!tpu.dma_semaphore, #tpu.memory_space<semaphore_mem>> -> memref<1x1x!tpu.dma_semaphore, #tpu.memory_space<semaphore_mem>>
        %265 = tpu.memref_squeeze %264 : memref<1x1x!tpu.dma_semaphore, #tpu.memory_space<semaphore_mem>> -> memref<!tpu.dma_semaphore, #tpu.memory_space<semaphore_mem>>
        tpu.enqueue_dma source(%261 : memref<1x256xf32, #tpu.memory_space<any>>) target(%263 : memref<1x256xf32, #tpu.memory_space<vmem>>) target_semaphore(%265 : memref<!tpu.dma_semaphore, #tpu.memory_space<semaphore_mem>>)
        %266 = arith.addi %76, %257 : i32
        %267 = arith.index_cast %266 : i32 to index
        %268 = memref.load %arg3[%267] : memref<24xi32, #tpu.memory_space<smem>>
        %c1_i32_110 = arith.constant 1 : i32
        %c0_i32_111 = arith.constant 0 : i32
        %269 = tpu.memref_slice %arg5[%268, %c0_i32_111] : memref<64x256xf32, #tpu.memory_space<any>> -> memref<1x256xf32, #tpu.memory_space<any>>
        %c0_i32_112 = arith.constant 0 : i32
        %270 = tpu.memref_slice %arg9[%72, %257, %c0_i32_112] : memref<2x24x256xf32, #tpu.memory_space<vmem>> -> memref<1x1x256xf32, #tpu.memory_space<vmem>>
        %271 = tpu.memref_squeeze %270 : memref<1x1x256xf32, #tpu.memory_space<vmem>> -> memref<1x256xf32, #tpu.memory_space<vmem>>
        %272 = tpu.memref_slice %arg11[%72, %c1_i32_110] : memref<2x3x!tpu.dma_semaphore, #tpu.memory_space<semaphore_mem>> -> memref<1x1x!tpu.dma_semaphore, #tpu.memory_space<semaphore_mem>>
        %273 = tpu.memref_squeeze %272 : memref<1x1x!tpu.dma_semaphore, #tpu.memory_space<semaphore_mem>> -> memref<!tpu.dma_semaphore, #tpu.memory_space<semaphore_mem>>
        tpu.enqueue_dma source(%269 : memref<1x256xf32, #tpu.memory_space<any>>) target(%271 : memref<1x256xf32, #tpu.memory_space<vmem>>) target_semaphore(%273 : memref<!tpu.dma_semaphore, #tpu.memory_space<semaphore_mem>>)
        %274 = arith.addi %76, %257 : i32
        %275 = arith.index_cast %274 : i32 to index
        %276 = memref.load %arg4[%275] : memref<24xi32, #tpu.memory_space<smem>>
        %c2_i32_113 = arith.constant 2 : i32
        %c0_i32_114 = arith.constant 0 : i32
        %277 = tpu.memref_slice %arg6[%276, %c0_i32_114] : memref<16x256xf32, #tpu.memory_space<any>> -> memref<1x256xf32, #tpu.memory_space<any>>
        %c0_i32_115 = arith.constant 0 : i32
        %278 = tpu.memref_slice %arg10[%72, %257, %c0_i32_115] : memref<2x24x256xf32, #tpu.memory_space<vmem>> -> memref<1x1x256xf32, #tpu.memory_space<vmem>>
        %279 = tpu.memref_squeeze %278 : memref<1x1x256xf32, #tpu.memory_space<vmem>> -> memref<1x256xf32, #tpu.memory_space<vmem>>
        %280 = tpu.memref_slice %arg11[%72, %c2_i32_113] : memref<2x3x!tpu.dma_semaphore, #tpu.memory_space<semaphore_mem>> -> memref<1x1x!tpu.dma_semaphore, #tpu.memory_space<semaphore_mem>>
        %281 = tpu.memref_squeeze %280 : memref<1x1x!tpu.dma_semaphore, #tpu.memory_space<semaphore_mem>> -> memref<!tpu.dma_semaphore, #tpu.memory_space<semaphore_mem>>
        tpu.enqueue_dma source(%277 : memref<1x256xf32, #tpu.memory_space<any>>) target(%279 : memref<1x256xf32, #tpu.memory_space<vmem>>) target_semaphore(%281 : memref<!tpu.dma_semaphore, #tpu.memory_space<semaphore_mem>>)
      }
      %c3_i32_37 = arith.constant 3 : i32
    } else {
    }
    %c0_i32_8 = arith.constant 0 : i32
    %c0_i32_9 = arith.constant 0 : i32
    %c0_i32_10 = arith.constant 0 : i32
    %17 = tpu.memref_slice %arg8[%9, %c0_i32_9, %c0_i32_10] : memref<2x24x256xf32, #tpu.memory_space<vmem>> -> memref<1x24x256xf32, #tpu.memory_space<vmem>>
    %18 = tpu.memref_squeeze %17 : memref<1x24x256xf32, #tpu.memory_space<vmem>> -> memref<24x256xf32, #tpu.memory_space<vmem>>
    %c0_i32_11 = arith.constant 0 : i32
    %c0_i32_12 = arith.constant 0 : i32
    %19 = tpu.memref_slice %arg8[%9, %c0_i32_11, %c0_i32_12] : memref<2x24x256xf32, #tpu.memory_space<vmem>> -> memref<1x24x256xf32, #tpu.memory_space<vmem>>
    %20 = tpu.memref_squeeze %19 : memref<1x24x256xf32, #tpu.memory_space<vmem>> -> memref<24x256xf32, #tpu.memory_space<vmem>>
    %21 = tpu.memref_slice %arg11[%9, %c0_i32_8] : memref<2x3x!tpu.dma_semaphore, #tpu.memory_space<semaphore_mem>> -> memref<1x1x!tpu.dma_semaphore, #tpu.memory_space<semaphore_mem>>
    %22 = tpu.memref_squeeze %21 : memref<1x1x!tpu.dma_semaphore, #tpu.memory_space<semaphore_mem>> -> memref<!tpu.dma_semaphore, #tpu.memory_space<semaphore_mem>>
    tpu.wait_dma2 semaphore(%22 : memref<!tpu.dma_semaphore, #tpu.memory_space<semaphore_mem>>) src(%18 : memref<24x256xf32, #tpu.memory_space<vmem>>) dst(%20 : memref<24x256xf32, #tpu.memory_space<vmem>>)
    %c1_i32_13 = arith.constant 1 : i32
    %c0_i32_14 = arith.constant 0 : i32
    %c0_i32_15 = arith.constant 0 : i32
    %23 = tpu.memref_slice %arg9[%9, %c0_i32_14, %c0_i32_15] : memref<2x24x256xf32, #tpu.memory_space<vmem>> -> memref<1x24x256xf32, #tpu.memory_space<vmem>>
    %24 = tpu.memref_squeeze %23 : memref<1x24x256xf32, #tpu.memory_space<vmem>> -> memref<24x256xf32, #tpu.memory_space<vmem>>
    %c0_i32_16 = arith.constant 0 : i32
    %c0_i32_17 = arith.constant 0 : i32
    %25 = tpu.memref_slice %arg9[%9, %c0_i32_16, %c0_i32_17] : memref<2x24x256xf32, #tpu.memory_space<vmem>> -> memref<1x24x256xf32, #tpu.memory_space<vmem>>
    %26 = tpu.memref_squeeze %25 : memref<1x24x256xf32, #tpu.memory_space<vmem>> -> memref<24x256xf32, #tpu.memory_space<vmem>>
    %27 = tpu.memref_slice %arg11[%9, %c1_i32_13] : memref<2x3x!tpu.dma_semaphore, #tpu.memory_space<semaphore_mem>> -> memref<1x1x!tpu.dma_semaphore, #tpu.memory_space<semaphore_mem>>
    %28 = tpu.memref_squeeze %27 : memref<1x1x!tpu.dma_semaphore, #tpu.memory_space<semaphore_mem>> -> memref<!tpu.dma_semaphore, #tpu.memory_space<semaphore_mem>>
    tpu.wait_dma2 semaphore(%28 : memref<!tpu.dma_semaphore, #tpu.memory_space<semaphore_mem>>) src(%24 : memref<24x256xf32, #tpu.memory_space<vmem>>) dst(%26 : memref<24x256xf32, #tpu.memory_space<vmem>>)
    %c2_i32_18 = arith.constant 2 : i32
    %c0_i32_19 = arith.constant 0 : i32
    %c0_i32_20 = arith.constant 0 : i32
    %29 = tpu.memref_slice %arg10[%9, %c0_i32_19, %c0_i32_20] : memref<2x24x256xf32, #tpu.memory_space<vmem>> -> memref<1x24x256xf32, #tpu.memory_space<vmem>>
    %30 = tpu.memref_squeeze %29 : memref<1x24x256xf32, #tpu.memory_space<vmem>> -> memref<24x256xf32, #tpu.memory_space<vmem>>
    %c0_i32_21 = arith.constant 0 : i32
    %c0_i32_22 = arith.constant 0 : i32
    %31 = tpu.memref_slice %arg10[%9, %c0_i32_21, %c0_i32_22] : memref<2x24x256xf32, #tpu.memory_space<vmem>> -> memref<1x24x256xf32, #tpu.memory_space<vmem>>
    %32 = tpu.memref_squeeze %31 : memref<1x24x256xf32, #tpu.memory_space<vmem>> -> memref<24x256xf32, #tpu.memory_space<vmem>>
    %33 = tpu.memref_slice %arg11[%9, %c2_i32_18] : memref<2x3x!tpu.dma_semaphore, #tpu.memory_space<semaphore_mem>> -> memref<1x1x!tpu.dma_semaphore, #tpu.memory_space<semaphore_mem>>
    %34 = tpu.memref_squeeze %33 : memref<1x1x!tpu.dma_semaphore, #tpu.memory_space<semaphore_mem>> -> memref<!tpu.dma_semaphore, #tpu.memory_space<semaphore_mem>>
    tpu.wait_dma2 semaphore(%34 : memref<!tpu.dma_semaphore, #tpu.memory_space<semaphore_mem>>) src(%30 : memref<24x256xf32, #tpu.memory_space<vmem>>) dst(%32 : memref<24x256xf32, #tpu.memory_space<vmem>>)
    %35 = arith.index_cast %9 : i32 to index
    %c0 = arith.constant 0 : index
    %c0_23 = arith.constant 0 : index
    %36 = vector.load %arg8[%35, %c0, %c0_23] : memref<2x24x256xf32, #tpu.memory_space<vmem>>, vector<1x24x256xf32>
    %37 = vector.shape_cast %36 : vector<1x24x256xf32> to vector<24x256xf32>
    %38 = arith.index_cast %9 : i32 to index
    %c0_24 = arith.constant 0 : index
    %c0_25 = arith.constant 0 : index
    %39 = vector.load %arg9[%38, %c0_24, %c0_25] : memref<2x24x256xf32, #tpu.memory_space<vmem>>, vector<1x24x256xf32>
    %40 = vector.shape_cast %39 : vector<1x24x256xf32> to vector<24x256xf32>
    %41 = arith.index_cast %9 : i32 to index
    %c0_26 = arith.constant 0 : index
    %c0_27 = arith.constant 0 : index
    %42 = vector.load %arg10[%41, %c0_26, %c0_27] : memref<2x24x256xf32, #tpu.memory_space<vmem>>, vector<1x24x256xf32>
    %43 = vector.shape_cast %42 : vector<1x24x256xf32> to vector<24x256xf32>
    %44 = vector.extract_strided_slice %37 {offsets = [0, 0], sizes = [24, 128], strides = [1, 1]} : vector<24x256xf32> to vector<24x128xf32>
    %45 = vector.extract_strided_slice %37 {offsets = [0, 128], sizes = [24, 128], strides = [1, 1]} : vector<24x256xf32> to vector<24x128xf32>
    %46 = vector.extract_strided_slice %40 {offsets = [0, 0], sizes = [24, 128], strides = [1, 1]} : vector<24x256xf32> to vector<24x128xf32>
    %47 = vector.extract_strided_slice %40 {offsets = [0, 128], sizes = [24, 128], strides = [1, 1]} : vector<24x256xf32> to vector<24x128xf32>
    %48 = vector.extract_strided_slice %43 {offsets = [0, 0], sizes = [24, 128], strides = [1, 1]} : vector<24x256xf32> to vector<24x128xf32>
    %49 = vector.extract_strided_slice %43 {offsets = [0, 128], sizes = [24, 128], strides = [1, 1]} : vector<24x256xf32> to vector<24x128xf32>
    %50 = arith.mulf %44, %48 : vector<24x128xf32>
    %51 = arith.mulf %45, %49 : vector<24x128xf32>
    %52 = arith.subf %50, %51 : vector<24x128xf32>
    %53 = arith.subf %52, %46 : vector<24x128xf32>
    %54 = arith.mulf %44, %49 : vector<24x128xf32>
    %55 = arith.mulf %45, %48 : vector<24x128xf32>
    %56 = arith.addf %54, %55 : vector<24x128xf32>
    %57 = arith.subf %56, %47 : vector<24x128xf32>
    %58 = arith.mulf %53, %53 : vector<24x128xf32>
    %59 = arith.mulf %57, %57 : vector<24x128xf32>
    %60 = arith.addf %58, %59 : vector<24x128xf32>
    %61 = math.sqrt %60 : vector<24x128xf32>
    %cst = arith.constant dense<0.000000e+00> : vector<24xf32>
    %62 = vector.multi_reduction <add>, %61, %cst [1] : vector<24x128xf32> to vector<24xf32>
    %63 = vector.shape_cast %62 : vector<24xf32> to vector<24x1xf32>
    %cst_28 = arith.constant 1.200000e+01 : f32
    %64 = vector.broadcast %cst_28 : f32 to vector<24x1xf32>
    %65 = arith.subf %64, %63 : vector<24x1xf32>
    %66 = arith.negf %65 : vector<24x1xf32>
    %67 = math.exp %66 : vector<24x1xf32>
    %cst_29 = arith.constant 1.000000e+00 : f32
    %68 = vector.broadcast %cst_29 : f32 to vector<24x1xf32>
    %69 = arith.addf %68, %67 : vector<24x1xf32>
    %70 = arith.divf %68, %69 : vector<24x1xf32>
    %c0_30 = arith.constant 0 : index
    %c0_31 = arith.constant 0 : index
    %71 = vector.load %arg7[%c0_30, %c0_31] : memref<24x1xf32, #tpu.memory_space<vmem>>, vector<24x1xf32>
    tpu.vector_store %arg7[%c0_30, %c0_31], %70 {strides = array<i32>} : memref<24x1xf32, #tpu.memory_space<vmem>>, vector<24x1xf32>,
    return
  }
  func.func @transform_2(%arg0: i32, %arg1: i32, %arg2: memref<24xi32, #tpu.memory_space<smem>>, %arg3: memref<24xi32, #tpu.memory_space<smem>>, %arg4: memref<24xi32, #tpu.memory_space<smem>>) -> (i32, i32) {
    %c1_i32 = arith.constant 1 : i32
    %0 = arith.muli %arg0, %c1_i32 : i32
    %1 = arith.addi %0, %arg1 : i32
    %c0_i32 = arith.constant 0 : i32
    %c0_i32_0 = arith.constant 0 : i32
    return %1, %c0_i32 : i32, i32
  }
}

</mosaic_0001>

<llo_original>
// kernel: tpu_custom_call.1
$region0: #{tpu_custom_call.1}
  #allocation0 [shape = 'u32[]', space=smem, size = 0x4, offset = 0x4, fixed_abs, tag = 'smem constant byte address 0x4 - core index']
  #allocation1 [shape = 'u32[72,128]{1,0:T(1,128)}', space=vmem, size = 0x9000, scoped, tag = 'internal scratch']
  #allocation2 [shape = 'f32[2,24,256]{2,1,0:T(8,128)}', space=vmem, size = 0xc000, scoped, tag = 'scratch operand']
  #allocation3 [shape = 'f32[2,24,256]{2,1,0:T(8,128)}', space=vmem, size = 0xc000, scoped, tag = 'scratch operand']
  #allocation4 [shape = 'f32[2,24,256]{2,1,0:T(8,128)}', space=vmem, size = 0xc000, scoped, tag = 'scratch operand']
  #allocation5 [shape = 's32[6]{0}', space=sflag, size = 0x18, scoped, tag = 'scratch operand']
  #allocation6 [shape = 's32[1]{0}', space=sflag, size = 0x4, scoped, tag = 'scoped memory for tpu_custom_call.1']
  #allocation7 [shape = 'u8[512]{0}', space=smem, size = 0x200, scoped, tag = 'prefetched SMEM operand 0']
  #allocation8 [shape = 'u8[512]{0}', space=smem, size = 0x200, scoped, tag = 'prefetched SMEM operand 1']
  #allocation9 [shape = 'u8[512]{0}', space=smem, size = 0x200, scoped, tag = 'prefetched SMEM operand 2']
  #allocation10 [shape = 's32[]', space=sflag, size = 0x4, offset = 0, fixed_abs, tag = 'sflag constant byte address 0x0 - dummy sync flag']
  #allocation11 [shape = 's32[]', space=sflag, size = 0x4, offset = 0, fixed_abs, tag = 'sflag constant byte address 0x0 - dummy sync flag']
  #allocation12 [shape = 's32[]', space=sflag, size = 0x4, offset = 0, fixed_abs, tag = 'sflag constant byte address 0x0 - dummy sync flag']
  #allocation13 [shape = 's32[]', space=sflag, size = 0x4, offset = 0, fixed_abs, tag = 'sflag constant byte address 0x0 - dummy sync flag']
  #allocation14 [shape = 's32[]', space=sflag, size = 0x4, offset = 0, fixed_abs, tag = 'sflag constant byte address 0x0 - dummy sync flag']
  #allocation15 [shape = 's32[]', space=sflag, size = 0x4, offset = 0, fixed_abs, tag = 'sflag constant byte address 0x0 - dummy sync flag']
  #allocation16 [shape = 's32[]', space=sflag, size = 0x4, offset = 0, fixed_abs, tag = 'sflag constant byte address 0x0 - dummy sync flag']
  #allocation17 [shape = 's32[]', space=sflag, size = 0x4, offset = 0, fixed_abs, tag = 'sflag constant byte address 0x0 - dummy sync flag']
  #allocation18 [shape = 's32[]', space=sflag, size = 0x4, offset = 0, fixed_abs, tag = 'sflag constant byte address 0x0 - dummy sync flag']
  #allocation19 [shape = 's32[]', space=sflag, size = 0x4, offset = 0, fixed_abs, tag = 'sflag constant byte address 0x0 - dummy sync flag']
  #allocation20 [shape = 's32[]', space=sflag, size = 0x4, offset = 0, fixed_abs, tag = 'sflag constant byte address 0x0 - dummy sync flag']
  #allocation21 [shape = 's32[]', space=sflag, size = 0x4, offset = 0, fixed_abs, tag = 'sflag constant byte address 0x0 - dummy sync flag']
  #allocation22 [shape = 's32[]', space=sflag, size = 0x4, offset = 0, fixed_abs, tag = 'sflag constant byte address 0x0 - dummy sync flag']
  #allocation23 [shape = 's32[]', space=sflag, size = 0x4, offset = 0, fixed_abs, tag = 'sflag constant byte address 0x0 - dummy sync flag']
  #allocation24 [shape = 's32[]', space=sflag, size = 0x4, offset = 0, fixed_abs, tag = 'sflag constant byte address 0x0 - dummy sync flag']
  #allocation25 [shape = 's32[]', space=sflag, size = 0x4, offset = 0, fixed_abs, tag = 'sflag constant byte address 0x0 - dummy sync flag']
  #allocation26 [shape = 's32[]', space=sflag, size = 0x4, offset = 0, fixed_abs, tag = 'sflag constant byte address 0x0 - dummy sync flag']
  #allocation27 [shape = 's32[]', space=sflag, size = 0x4, offset = 0, fixed_abs, tag = 'sflag constant byte address 0x0 - dummy sync flag']
  #allocation28 [shape = 's32[]', space=sflag, size = 0x4, offset = 0, fixed_abs, tag = 'sflag constant byte address 0x0 - dummy sync flag']
  #allocation29 [shape = 's32[]', space=sflag, size = 0x4, offset = 0, fixed_abs, tag = 'sflag constant byte address 0x0 - dummy sync flag']
  #allocation30 [shape = 's32[]', space=sflag, size = 0x4, offset = 0, fixed_abs, tag = 'sflag constant byte address 0x0 - dummy sync flag']
  #allocation31 [shape = 's32[]', space=sflag, size = 0x4, offset = 0, fixed_abs, tag = 'sflag constant byte address 0x0 - dummy sync flag']
  #allocation32 [shape = 's32[]', space=sflag, size = 0x4, offset = 0, fixed_abs, tag = 'sflag constant byte address 0x0 - dummy sync flag']
  #allocation33 [shape = 's32[]', space=sflag, size = 0x4, offset = 0, fixed_abs, tag = 'sflag constant byte address 0x0 - dummy sync flag']
  #allocation34 [shape = 's32[]', space=sflag, size = 0x4, offset = 0, fixed_abs, tag = 'sflag constant byte address 0x0 - dummy sync flag']
  #allocation35 [shape = 's32[]', space=sflag, size = 0x4, offset = 0, fixed_abs, tag = 'sflag constant byte address 0x0 - dummy sync flag']
  #allocation36 [shape = 's32[]', space=sflag, size = 0x4, offset = 0, fixed_abs, tag = 'sflag constant byte address 0x0 - dummy sync flag']
  #allocation37 [shape = 's32[]', space=sflag, size = 0x4, offset = 0, fixed_abs, tag = 'sflag constant byte address 0x0 - dummy sync flag']
  #allocation38 [shape = 's32[]', space=sflag, size = 0x4, offset = 0, fixed_abs, tag = 'sflag constant byte address 0x0 - dummy sync flag']
  #allocation39 [shape = 's32[]', space=sflag, size = 0x4, offset = 0, fixed_abs, tag = 'sflag constant byte address 0x0 - dummy sync flag']
  #allocation40 [shape = 's32[]', space=sflag, size = 0x4, offset = 0, fixed_abs, tag = 'sflag constant byte address 0x0 - dummy sync flag']
  #allocation41 [shape = 's32[]', space=sflag, size = 0x4, offset = 0, fixed_abs, tag = 'sflag constant byte address 0x0 - dummy sync flag']
  #allocation42 [shape = 's32[]', space=sflag, size = 0x4, offset = 0, fixed_abs, tag = 'sflag constant byte address 0x0 - dummy sync flag']
  #allocation43 [shape = 's32[]', space=sflag, size = 0x4, offset = 0, fixed_abs, tag = 'sflag constant byte address 0x0 - dummy sync flag']
  #allocation44 [shape = 's32[]', space=sflag, size = 0x4, offset = 0, fixed_abs, tag = 'sflag constant byte address 0x0 - dummy sync flag']
  #allocation45 [shape = 's32[]', space=sflag, size = 0x4, offset = 0, fixed_abs, tag = 'sflag constant byte address 0x0 - dummy sync flag']
  #allocation46 [shape = 's32[]', space=sflag, size = 0x4, offset = 0, fixed_abs, tag = 'sflag constant byte address 0x0 - dummy sync flag']
  #allocation47 [shape = 's32[]', space=sflag, size = 0x4, offset = 0, fixed_abs, tag = 'sflag constant byte address 0x0 - dummy sync flag']
  #allocation48 [shape = 's32[]', space=sflag, size = 0x4, offset = 0, fixed_abs, tag = 'sflag constant byte address 0x0 - dummy sync flag']
  #allocation49 [shape = 's32[]', space=sflag, size = 0x4, offset = 0, fixed_abs, tag = 'sflag constant byte address 0x0 - dummy sync flag']
  #allocation50 [shape = 's32[]', space=sflag, size = 0x4, offset = 0, fixed_abs, tag = 'sflag constant byte address 0x0 - dummy sync flag']
  #allocation51 [shape = 's32[]', space=sflag, size = 0x4, offset = 0, fixed_abs, tag = 'sflag constant byte address 0x0 - dummy sync flag']
  #allocation52 [shape = 's32[]', space=sflag, size = 0x4, offset = 0, fixed_abs, tag = 'sflag constant byte address 0x0 - dummy sync flag']
  #allocation53 [shape = 's32[]', space=sflag, size = 0x4, offset = 0, fixed_abs, tag = 'sflag constant byte address 0x0 - dummy sync flag']
  #allocation54 [shape = 's32[]', space=sflag, size = 0x4, offset = 0, fixed_abs, tag = 'sflag constant byte address 0x0 - dummy sync flag']
  #allocation55 [shape = 's32[]', space=sflag, size = 0x4, offset = 0, fixed_abs, tag = 'sflag constant byte address 0x0 - dummy sync flag']
  #allocation56 [shape = 's32[]', space=sflag, size = 0x4, offset = 0, fixed_abs, tag = 'sflag constant byte address 0x0 - dummy sync flag']
  #allocation57 [shape = 's32[]', space=sflag, size = 0x4, offset = 0, fixed_abs, tag = 'sflag constant byte address 0x0 - dummy sync flag']
  %s0 = inlined_call_operand.hbm [shape: s32[24], index: 0, kind: input, shape index: {}]
  %s1 = inlined_call_operand.hbm [shape: s32[24], index: 1, kind: input, shape index: {}]
  %s2 = inlined_call_operand.vmem [shape: s32[24], index: 2, kind: input, shape index: {}]
  %s3 = inlined_call_operand.hbm [shape: f32[64,256], index: 3, kind: input, shape index: {}]
  %s4 = inlined_call_operand.hbm [shape: f32[16,256], index: 4, kind: input, shape index: {}]
  %s5 = inlined_call_operand.vmem [shape: f32[24,1], index: 5, kind: output, shape index: {}]
  %s6 = sld [smem:[#allocation0]]
  $region32: #{tpu_custom_call.1} parent=0
    _
  %s8 = ssub.s32 1, %s6
  %s9 = scalar_select 0, %s8, %s6
  %s11 = sshll.u32 %s0, 4
  %s12 = int_to_ptr.hbm [resolvable:$true] %s11
  %14 = dma.hbm_to_smem %s12, 16, [#allocation7], [#allocation6]
  %s16 = sshll.u32 %s1, 4
  %s17 = int_to_ptr.hbm [resolvable:$true] %s16
  %19 = dma.hbm_to_smem %s17, 16, [#allocation8], [#allocation6]
  %s21 = sshll.u32 %s2, 4
  %s22 = int_to_ptr.vmem [resolvable:$true] %s21
  %24 = dma.vmem_to_smem %s22, 16, [#allocation9], [#allocation6]
  %26 = dma.done [#allocation6], 48
  %27 = sfence
  %s28 = sadd.s32 0, 0
  %s29 = smul.u32 3, %s28
  %p30 = scmp.lt.s32.totalorder %s29, 2
  %s31 = scalar_select %p30, %s29, 2
  %s32 = smul.addr %s31, 8
  %s33 = scalar_lea.vmem %s5, %s32
  %s34 = sadd.s32 0, 0
  %s35 = smul.u32 3, %s34
  %p36 = scmp.lt.s32.totalorder %s35, 2
  %s37 = scalar_select %p36, %s35, 2
  %s38 = smul.addr %s37, 8
  %s39 = scalar_lea.vmem %s5, %s38
  %s40 = sadd.s32 0, 0
  %s41 = smul.u32 3, %s40
  %s42 = ssub.s32 0, 0
  %s43 = ssub.s32 0, 0
  %p44 = scmp.ne.s32.totalorder 0, 0
  %p45 = scmp.lt.s32.totalorder 0, 0
  %p46 = pnand %p45, %p44
  %p47 = pneg %p46
  %s48 = sadd.s32 0, 2
  %s49 = scalar_select %p47, %s48, 0
  %p50 = scmp.eq.s32.totalorder 0, 0
  // Predicated region
  $region2: #{tpu_custom_call.1} parent=0 // pred_check
    %p51 = pneg %p50
  $region3: #{tpu_custom_call.1} parent=0 // pred_check_branch
    %53 = sbr.rel (%p51) target = $region5
  $region4: #{tpu_custom_call.1} parent=0 // pred_region
    %s54 = smul.u32 0, 24
    loop: start=0, step=1, limit=3
    $region6: #{tpu_custom_call.1} parent=4 // loop_pre_header
      _
    $region7: #{tpu_custom_call.1} parent=4 // loop_header
      %s56 = sphi 0, %s60
      %p57 = scmp.ge.s32.totalorder %s56, 3
    $region8: #{tpu_custom_call.1} parent=4 // loop_header_branch
      %59 = sbr.rel (%p57) target = $region12
    $region9: #{tpu_custom_call.1} parent=4 // loop_body
      %s61 = smul.u32 %s56, 8
      %s62 = sadd.s32 %s54, %s61
      %s63 = sld [smem:[#allocation7 + %s62]]
      %s64 = sshrl.u32 %s63, 3
      %s65 = sand.u32 %s63, 7
      %s66 = smul.u32 %s64, 16
      %s67 = sadd.s32 %s65, %s66
      %s68 = scalar_lea.hbm %s3, %s67
      %s69 = sshrl.u32 %s61, 3
      %s70 = sand.u32 %s61, 7
      %s71 = smul.u32 %s69, 16
      %s72 = sadd.s32 %s70, %s71
      %s73 = scalar_lea.vmem [#allocation2], %s72
      %s74 = sshll.u32 %s68, 4
      %s75 = int_to_ptr.hbm [resolvable:$true] %s74
      %s76 = sshll.u32 %s73, 4
      %s77 = int_to_ptr.vmem [resolvable:$true] %s76
      %81 = dma.hbm_to_vmem [thread:$0]  %s75, 32, %s77, [#allocation5], 128, 128, 1
      %s82 = sld [smem:[#allocation8 + %s62]]
      %s83 = sshrl.u32 %s82, 3
      %s84 = sand.u32 %s82, 7
      %s85 = smul.u32 %s83, 16
      %s86 = sadd.s32 %s84, %s85
      %s87 = scalar_lea.hbm %s3, %s86
      %s88 = scalar_lea.vmem [#allocation3], %s72
      %s89 = scalar_lea.sflag [#allocation5], 1
      %s90 = sshll.u32 %s87, 4
      %s91 = int_to_ptr.hbm [resolvable:$true] %s90
      %s92 = sshll.u32 %s88, 4
      %s93 = int_to_ptr.vmem [resolvable:$true] %s92
      %97 = dma.hbm_to_vmem [thread:$0]  %s91, 32, %s93, %s89, 128, 128, 1
      %s98 = sld [smem:[#allocation9 + %s62]]
      %s99 = sshrl.u32 %s98, 3
      %s100 = sand.u32 %s98, 7
      %s101 = smul.u32 %s99, 16
      %s102 = sadd.s32 %s100, %s101
      %s103 = scalar_lea.hbm %s4, %s102
      %s104 = scalar_lea.vmem [#allocation4], %s72
      %s105 = scalar_lea.sflag [#allocation5], 2
      %s106 = sshll.u32 %s103, 4
      %s107 = int_to_ptr.hbm [resolvable:$true] %s106
      %s108 = sshll.u32 %s104, 4
      %s109 = int_to_ptr.vmem [resolvable:$true] %s108
      %113 = dma.hbm_to_vmem [thread:$0]  %s107, 32, %s109, %s105, 128, 128, 1
      %s114 = sadd.s32 %s61, 1
      %s115 = sadd.s32 %s54, %s114
      %s116 = sld [smem:[#allocation7 + %s115]]
      %s117 = sshrl.u32 %s116, 3
      %s118 = sand.u32 %s116, 7
      %s119 = smul.u32 %s117, 16
      %s120 = sadd.s32 %s118, %s119
      %s121 = scalar_lea.hbm %s3, %s120
      %s122 = sshrl.u32 %s114, 3
      %s123 = sand.u32 %s114, 7
      %s124 = smul.u32 %s122, 16
      %s125 = sadd.s32 %s123, %s124
      %s126 = scalar_lea.vmem [#allocation2], %s125
      %s127 = sshll.u32 %s121, 4
      %s128 = int_to_ptr.hbm [resolvable:$true] %s127
      %s129 = sshll.u32 %s126, 4
      %s130 = int_to_ptr.vmem [resolvable:$true] %s129
      %134 = dma.hbm_to_vmem [thread:$0]  %s128, 32, %s130, [#allocation5], 128, 128, 1
      %s135 = sld [smem:[#allocation8 + %s115]]
      %s136 = sshrl.u32 %s135, 3
      %s137 = sand.u32 %s135, 7
      %s138 = smul.u32 %s136, 16
      %s139 = sadd.s32 %s137, %s138
      %s140 = scalar_lea.hbm %s3, %s139
      %s141 = scalar_lea.vmem [#allocation3], %s125
      %s142 = sshll.u32 %s140, 4
      %s143 = int_to_ptr.hbm [resolvable:$true] %s142
      %s144 = sshll.u32 %s141, 4
      %s145 = int_to_ptr.vmem [resolvable:$true] %s144
      %149 = dma.hbm_to_vmem [thread:$0]  %s143, 32, %s145, %s89, 128, 128, 1
      %s150 = sld [smem:[#allocation9 + %s115]]
      %s151 = sshrl.u32 %s150, 3
      %s152 = sand.u32 %s150, 7
      %s153 = smul.u32 %s151, 16
      %s154 = sadd.s32 %s152, %s153
      %s155 = scalar_lea.hbm %s4, %s154
      %s156 = scalar_lea.vmem [#allocation4], %s125
      %s157 = sshll.u32 %s155, 4
      %s158 = int_to_ptr.hbm [resolvable:$true] %s157
      %s159 = sshll.u32 %s156, 4
      %s160 = int_to_ptr.vmem [resolvable:$true] %s159
      %164 = dma.hbm_to_vmem [thread:$0]  %s158, 32, %s160, %s105, 128, 128, 1
      %s165 = sadd.s32 %s61, 2
      %s166 = sadd.s32 %s54, %s165
      %s167 = sld [smem:[#allocation7 + %s166]]
      %s168 = sshrl.u32 %s167, 3
      %s169 = sand.u32 %s167, 7
      %s170 = smul.u32 %s168, 16
      %s171 = sadd.s32 %s169, %s170
      %s172 = scalar_lea.hbm %s3, %s171
      %s173 = sshrl.u32 %s165, 3
      %s174 = sand.u32 %s165, 7
      %s175 = smul.u32 %s173, 16
      %s176 = sadd.s32 %s174, %s175
      %s177 = scalar_lea.vmem [#allocation2], %s176
      %s178 = sshll.u32 %s172, 4
      %s179 = int_to_ptr.hbm [resolvable:$true] %s178
      %s180 = sshll.u32 %s177, 4
      %s181 = int_to_ptr.vmem [resolvable:$true] %s180
      %185 = dma.hbm_to_vmem [thread:$0]  %s179, 32, %s181, [#allocation5], 128, 128, 1
      %s186 = sld [smem:[#allocation8 + %s166]]
      %s187 = sshrl.u32 %s186, 3
      %s188 = sand.u32 %s186, 7
      %s189 = smul.u32 %s187, 16
      %s190 = sadd.s32 %s188, %s189
      %s191 = scalar_lea.hbm %s3, %s190
      %s192 = scalar_lea.vmem [#allocation3], %s176
      %s193 = sshll.u32 %s191, 4
      %s194 = int_to_ptr.hbm [resolvable:$true] %s193
      %s195 = sshll.u32 %s192, 4
      %s196 = int_to_ptr.vmem [resolvable:$true] %s195
      %200 = dma.hbm_to_vmem [thread:$0]  %s194, 32, %s196, %s89, 128, 128, 1
      %s201 = sld [smem:[#allocation9 + %s166]]
      %s202 = sshrl.u32 %s201, 3
      %s203 = sand.u32 %s201, 7
      %s204 = smul.u32 %s202, 16
      %s205 = sadd.s32 %s203, %s204
      %s206 = scalar_lea.hbm %s4, %s205
      %s207 = scalar_lea.vmem [#allocation4], %s176
      %s208 = sshll.u32 %s206, 4
      %s209 = int_to_ptr.hbm [resolvable:$true] %s208
      %s210 = sshll.u32 %s207, 4
      %s211 = int_to_ptr.vmem [resolvable:$true] %s210
      %215 = dma.hbm_to_vmem [thread:$0]  %s209, 32, %s211, %s105, 128, 128, 1
      %s216 = sadd.s32 %s61, 3
      %s217 = sadd.s32 %s54, %s216
      %s218 = sld [smem:[#allocation7 + %s217]]
      %s219 = sshrl.u32 %s218, 3
      %s220 = sand.u32 %s218, 7
      %s221 = smul.u32 %s219, 16
      %s222 = sadd.s32 %s220, %s221
      %s223 = scalar_lea.hbm %s3, %s222
      %s224 = sshrl.u32 %s216, 3
      %s225 = sand.u32 %s216, 7
      %s226 = smul.u32 %s224, 16
      %s227 = sadd.s32 %s225, %s226
      %s228 = scalar_lea.vmem [#allocation2], %s227
      %s229 = sshll.u32 %s223, 4
      %s230 = int_to_ptr.hbm [resolvable:$true] %s229
      %s231 = sshll.u32 %s228, 4
      %s232 = int_to_ptr.vmem [resolvable:$true] %s231
      %236 = dma.hbm_to_vmem [thread:$0]  %s230, 32, %s232, [#allocation5], 128, 128, 1
      %s237 = sld [smem:[#allocation8 + %s217]]
      %s238 = sshrl.u32 %s237, 3
      %s239 = sand.u32 %s237, 7
      %s240 = smul.u32 %s238, 16
      %s241 = sadd.s32 %s239, %s240
      %s242 = scalar_lea.hbm %s3, %s241
      %s243 = scalar_lea.vmem [#allocation3], %s227
      %s244 = sshll.u32 %s242, 4
      %s245 = int_to_ptr.hbm [resolvable:$true] %s244
      %s246 = sshll.u32 %s243, 4
      %s247 = int_to_ptr.vmem [resolvable:$true] %s246
      %251 = dma.hbm_to_vmem [thread:$0]  %s245, 32, %s247, %s89, 128, 128, 1
      %s252 = sld [smem:[#allocation9 + %s217]]
      %s253 = sshrl.u32 %s252, 3
      %s254 = sand.u32 %s252, 7
      %s255 = smul.u32 %s253, 16
      %s256 = sadd.s32 %s254, %s255
      %s257 = scalar_lea.hbm %s4, %s256
      %s258 = scalar_lea.vmem [#allocation4], %s227
      %s259 = sshll.u32 %s257, 4
      %s260 = int_to_ptr.hbm [resolvable:$true] %s259
      %s261 = sshll.u32 %s258, 4
      %s262 = int_to_ptr.vmem [resolvable:$true] %s261
      %266 = dma.hbm_to_vmem [thread:$0]  %s260, 32, %s262, %s105, 128, 128, 1
      %s267 = sadd.s32 %s61, 4
      %s268 = sadd.s32 %s54, %s267
      %s269 = sld [smem:[#allocation7 + %s268]]
      %s270 = sshrl.u32 %s269, 3
      %s271 = sand.u32 %s269, 7
      %s272 = smul.u32 %s270, 16
      %s273 = sadd.s32 %s271, %s272
      %s274 = scalar_lea.hbm %s3, %s273
      %s275 = sshrl.u32 %s267, 3
      %s276 = sand.u32 %s267, 7
      %s277 = smul.u32 %s275, 16
      %s278 = sadd.s32 %s276, %s277
      %s279 = scalar_lea.vmem [#allocation2], %s278
      %s280 = sshll.u32 %s274, 4
      %s281 = int_to_ptr.hbm [resolvable:$true] %s280
      %s282 = sshll.u32 %s279, 4
      %s283 = int_to_ptr.vmem [resolvable:$true] %s282
      %287 = dma.hbm_to_vmem [thread:$0]  %s281, 32, %s283, [#allocation5], 128, 128, 1
      %s288 = sld [smem:[#allocation8 + %s268]]
      %s289 = sshrl.u32 %s288, 3
      %s290 = sand.u32 %s288, 7
      %s291 = smul.u32 %s289, 16
      %s292 = sadd.s32 %s290, %s291
      %s293 = scalar_lea.hbm %s3, %s292
      %s294 = scalar_lea.vmem [#allocation3], %s278
      %s295 = sshll.u32 %s293, 4
      %s296 = int_to_ptr.hbm [resolvable:$true] %s295
      %s297 = sshll.u32 %s294, 4
      %s298 = int_to_ptr.vmem [resolvable:$true] %s297
      %302 = dma.hbm_to_vmem [thread:$0]  %s296, 32, %s298, %s89, 128, 128, 1
      %s303 = sld [smem:[#allocation9 + %s268]]
      %s304 = sshrl.u32 %s303, 3
      %s305 = sand.u32 %s303, 7
      %s306 = smul.u32 %s304, 16
      %s307 = sadd.s32 %s305, %s306
      %s308 = scalar_lea.hbm %s4, %s307
      %s309 = scalar_lea.vmem [#allocation4], %s278
      %s310 = sshll.u32 %s308, 4
      %s311 = int_to_ptr.hbm [resolvable:$true] %s310
      %s312 = sshll.u32 %s309, 4
      %s313 = int_to_ptr.vmem [resolvable:$true] %s312
      %317 = dma.hbm_to_vmem [thread:$0]  %s311, 32, %s313, %s105, 128, 128, 1
      %s318 = sadd.s32 %s61, 5
      %s319 = sadd.s32 %s54, %s318
      %s320 = sld [smem:[#allocation7 + %s319]]
      %s321 = sshrl.u32 %s320, 3
      %s322 = sand.u32 %s320, 7
      %s323 = smul.u32 %s321, 16
      %s324 = sadd.s32 %s322, %s323
      %s325 = scalar_lea.hbm %s3, %s324
      %s326 = sshrl.u32 %s318, 3
      %s327 = sand.u32 %s318, 7
      %s328 = smul.u32 %s326, 16
      %s329 = sadd.s32 %s327, %s328
      %s330 = scalar_lea.vmem [#allocation2], %s329
      %s331 = sshll.u32 %s325, 4
      %s332 = int_to_ptr.hbm [resolvable:$true] %s331
      %s333 = sshll.u32 %s330, 4
      %s334 = int_to_ptr.vmem [resolvable:$true] %s333
      %338 = dma.hbm_to_vmem [thread:$0]  %s332, 32, %s334, [#allocation5], 128, 128, 1
      %s339 = sld [smem:[#allocation8 + %s319]]
      %s340 = sshrl.u32 %s339, 3
      %s341 = sand.u32 %s339, 7
      %s342 = smul.u32 %s340, 16
      %s343 = sadd.s32 %s341, %s342
      %s344 = scalar_lea.hbm %s3, %s343
      %s345 = scalar_lea.vmem [#allocation3], %s329
      %s346 = sshll.u32 %s344, 4
      %s347 = int_to_ptr.hbm [resolvable:$true] %s346
      %s348 = sshll.u32 %s345, 4
      %s349 = int_to_ptr.vmem [resolvable:$true] %s348
      %353 = dma.hbm_to_vmem [thread:$0]  %s347, 32, %s349, %s89, 128, 128, 1
      %s354 = sld [smem:[#allocation9 + %s319]]
      %s355 = sshrl.u32 %s354, 3
      %s356 = sand.u32 %s354, 7
      %s357 = smul.u32 %s355, 16
      %s358 = sadd.s32 %s356, %s357
      %s359 = scalar_lea.hbm %s4, %s358
      %s360 = scalar_lea.vmem [#allocation4], %s329
      %s361 = sshll.u32 %s359, 4
      %s362 = int_to_ptr.hbm [resolvable:$true] %s361
      %s363 = sshll.u32 %s360, 4
      %s364 = int_to_ptr.vmem [resolvable:$true] %s363
      %368 = dma.hbm_to_vmem [thread:$0]  %s362, 32, %s364, %s105, 128, 128, 1
      %s369 = sadd.s32 %s61, 6
      %s370 = sadd.s32 %s54, %s369
      %s371 = sld [smem:[#allocation7 + %s370]]
      %s372 = sshrl.u32 %s371, 3
      %s373 = sand.u32 %s371, 7
      %s374 = smul.u32 %s372, 16
      %s375 = sadd.s32 %s373, %s374
      %s376 = scalar_lea.hbm %s3, %s375
      %s377 = sshrl.u32 %s369, 3
      %s378 = sand.u32 %s369, 7
      %s379 = smul.u32 %s377, 16
      %s380 = sadd.s32 %s378, %s379
      %s381 = scalar_lea.vmem [#allocation2], %s380
      %s382 = sshll.u32 %s376, 4
      %s383 = int_to_ptr.hbm [resolvable:$true] %s382
      %s384 = sshll.u32 %s381, 4
      %s385 = int_to_ptr.vmem [resolvable:$true] %s384
      %389 = dma.hbm_to_vmem [thread:$0]  %s383, 32, %s385, [#allocation5], 128, 128, 1
      %s390 = sld [smem:[#allocation8 + %s370]]
      %s391 = sshrl.u32 %s390, 3
      %s392 = sand.u32 %s390, 7
      %s393 = smul.u32 %s391, 16
      %s394 = sadd.s32 %s392, %s393
      %s395 = scalar_lea.hbm %s3, %s394
      %s396 = scalar_lea.vmem [#allocation3], %s380
      %s397 = sshll.u32 %s395, 4
      %s398 = int_to_ptr.hbm [resolvable:$true] %s397
      %s399 = sshll.u32 %s396, 4
      %s400 = int_to_ptr.vmem [resolvable:$true] %s399
      %404 = dma.hbm_to_vmem [thread:$0]  %s398, 32, %s400, %s89, 128, 128, 1
      %s405 = sld [smem:[#allocation9 + %s370]]
      %s406 = sshrl.u32 %s405, 3
      %s407 = sand.u32 %s405, 7
      %s408 = smul.u32 %s406, 16
      %s409 = sadd.s32 %s407, %s408
      %s410 = scalar_lea.hbm %s4, %s409
      %s411 = scalar_lea.vmem [#allocation4], %s380
      %s412 = sshll.u32 %s410, 4
      %s413 = int_to_ptr.hbm [resolvable:$true] %s412
      %s414 = sshll.u32 %s411, 4
      %s415 = int_to_ptr.vmem [resolvable:$true] %s414
      %419 = dma.hbm_to_vmem [thread:$0]  %s413, 32, %s415, %s105, 128, 128, 1
      %s420 = sadd.s32 %s61, 7
      %s421 = sadd.s32 %s54, %s420
      %s422 = sld [smem:[#allocation7 + %s421]]
      %s423 = sshrl.u32 %s422, 3
      %s424 = sand.u32 %s422, 7
      %s425 = smul.u32 %s423, 16
      %s426 = sadd.s32 %s424, %s425
      %s427 = scalar_lea.hbm %s3, %s426
      %s428 = sshrl.u32 %s420, 3
      %s429 = sand.u32 %s420, 7
      %s430 = smul.u32 %s428, 16
      %s431 = sadd.s32 %s429, %s430
      %s432 = scalar_lea.vmem [#allocation2], %s431
      %s433 = sshll.u32 %s427, 4
      %s434 = int_to_ptr.hbm [resolvable:$true] %s433
      %s435 = sshll.u32 %s432, 4
      %s436 = int_to_ptr.vmem [resolvable:$true] %s435
      %440 = dma.hbm_to_vmem [thread:$0]  %s434, 32, %s436, [#allocation5], 128, 128, 1
      %s441 = sld [smem:[#allocation8 + %s421]]
      %s442 = sshrl.u32 %s441, 3
      %s443 = sand.u32 %s441, 7
      %s444 = smul.u32 %s442, 16
      %s445 = sadd.s32 %s443, %s444
      %s446 = scalar_lea.hbm %s3, %s445
      %s447 = scalar_lea.vmem [#allocation3], %s431
      %s448 = sshll.u32 %s446, 4
      %s449 = int_to_ptr.hbm [resolvable:$true] %s448
      %s450 = sshll.u32 %s447, 4
      %s451 = int_to_ptr.vmem [resolvable:$true] %s450
      %455 = dma.hbm_to_vmem [thread:$0]  %s449, 32, %s451, %s89, 128, 128, 1
      %s456 = sld [smem:[#allocation9 + %s421]]
      %s457 = sshrl.u32 %s456, 3
      %s458 = sand.u32 %s456, 7
      %s459 = smul.u32 %s457, 16
      %s460 = sadd.s32 %s458, %s459
      %s461 = scalar_lea.hbm %s4, %s460
      %s462 = scalar_lea.vmem [#allocation4], %s431
      %s463 = sshll.u32 %s461, 4
      %s464 = int_to_ptr.hbm [resolvable:$true] %s463
      %s465 = sshll.u32 %s462, 4
      %s466 = int_to_ptr.vmem [resolvable:$true] %s465
      %470 = dma.hbm_to_vmem [thread:$0]  %s464, 32, %s466, %s105, 128, 128, 1
    $region10: #{tpu_custom_call.1} parent=4 // loop_footer
      %s60 = sadd.s32 1, %s56
    $region11: #{tpu_custom_call.1} parent=4 // loop_footer_branch
      %55 = sbr.rel target = $region7
    $region12: #{tpu_custom_call.1} parent=4 // loop_exit
      _
  $region5: #{tpu_custom_call.1} parent=0 // pred_fallthru
    _
  %s471 = sadd.s32 0, 1
  %p472 = scmp.lt.s32.totalorder %s471, 1
  // Predicated region
  $region13: #{tpu_custom_call.1} parent=0 // pred_check
    %p473 = pneg %p472
  $region14: #{tpu_custom_call.1} parent=0 // pred_check_branch
    %475 = sbr.rel (%p473) target = $region16
  $region15: #{tpu_custom_call.1} parent=0 // pred_region
    %s476 = ssub.s32 1, %s49
    %s477 = sadd.s32 0, 0
    %s478 = sadd.s32 %s477, 1
    %s479 = smul.u32 %s478, 24
    loop: start=0, step=1, limit=3
    $region17: #{tpu_custom_call.1} parent=15 // loop_pre_header
      _
    $region18: #{tpu_custom_call.1} parent=15 // loop_header
      %s481 = sphi 0, %s485
      %p482 = scmp.ge.s32.totalorder %s481, 3
    $region19: #{tpu_custom_call.1} parent=15 // loop_header_branch
      %484 = sbr.rel (%p482) target = $region23
    $region20: #{tpu_custom_call.1} parent=15 // loop_body
      %s486 = smul.u32 %s481, 8
      %s487 = sadd.s32 %s479, %s486
      %s488 = sld [smem:[#allocation7 + %s487]]
      %s489 = sshrl.u32 %s488, 3
      %s490 = sand.u32 %s488, 7
      %s491 = smul.u32 %s489, 16
      %s492 = sadd.s32 %s490, %s491
      %s493 = scalar_lea.hbm %s3, %s492
      %s494 = sshrl.u32 %s486, 3
      %s495 = sand.u32 %s486, 7
      %s496 = smul.u32 %s494, 16
      %s497 = sadd.s32 %s495, %s496
      %s498 = smul.u32 %s476, 48
      %s499 = sadd.s32 %s497, %s498
      %s500 = scalar_lea.vmem [#allocation2], %s499
      %s501 = smul.u32 %s476, 3
      %s502 = scalar_lea.sflag [#allocation5], %s501
      %s503 = sshll.u32 %s493, 4
      %s504 = int_to_ptr.hbm [resolvable:$true] %s503
      %s505 = sshll.u32 %s500, 4
      %s506 = int_to_ptr.vmem [resolvable:$true] %s505
      %510 = dma.hbm_to_vmem [thread:$0]  %s504, 32, %s506, %s502, 128, 128, 1
      %s511 = sld [smem:[#allocation8 + %s487]]
      %s512 = sshrl.u32 %s511, 3
      %s513 = sand.u32 %s511, 7
      %s514 = smul.u32 %s512, 16
      %s515 = sadd.s32 %s513, %s514
      %s516 = scalar_lea.hbm %s3, %s515
      %s517 = scalar_lea.vmem [#allocation3], %s499
      %s518 = sadd.s32 1, %s501
      %s519 = scalar_lea.sflag [#allocation5], %s518
      %s520 = sshll.u32 %s516, 4
      %s521 = int_to_ptr.hbm [resolvable:$true] %s520
      %s522 = sshll.u32 %s517, 4
      %s523 = int_to_ptr.vmem [resolvable:$true] %s522
      %527 = dma.hbm_to_vmem [thread:$0]  %s521, 32, %s523, %s519, 128, 128, 1
      %s528 = sld [smem:[#allocation9 + %s487]]
      %s529 = sshrl.u32 %s528, 3
      %s530 = sand.u32 %s528, 7
      %s531 = smul.u32 %s529, 16
      %s532 = sadd.s32 %s530, %s531
      %s533 = scalar_lea.hbm %s4, %s532
      %s534 = scalar_lea.vmem [#allocation4], %s499
      %s535 = sadd.s32 2, %s501
      %s536 = scalar_lea.sflag [#allocation5], %s535
      %s537 = sshll.u32 %s533, 4
      %s538 = int_to_ptr.hbm [resolvable:$true] %s537
      %s539 = sshll.u32 %s534, 4
      %s540 = int_to_ptr.vmem [resolvable:$true] %s539
      %544 = dma.hbm_to_vmem [thread:$0]  %s538, 32, %s540, %s536, 128, 128, 1
      %s545 = sadd.s32 %s486, 1
      %s546 = sadd.s32 %s479, %s545
      %s547 = sld [smem:[#allocation7 + %s546]]
      %s548 = sshrl.u32 %s547, 3
      %s549 = sand.u32 %s547, 7
      %s550 = smul.u32 %s548, 16
      %s551 = sadd.s32 %s549, %s550
      %s552 = scalar_lea.hbm %s3, %s551
      %s553 = sshrl.u32 %s545, 3
      %s554 = sand.u32 %s545, 7
      %s555 = smul.u32 %s553, 16
      %s556 = sadd.s32 %s554, %s555
      %s557 = sadd.s32 %s556, %s498
      %s558 = scalar_lea.vmem [#allocation2], %s557
      %s559 = sshll.u32 %s552, 4
      %s560 = int_to_ptr.hbm [resolvable:$true] %s559
      %s561 = sshll.u32 %s558, 4
      %s562 = int_to_ptr.vmem [resolvable:$true] %s561
      %566 = dma.hbm_to_vmem [thread:$0]  %s560, 32, %s562, %s502, 128, 128, 1
      %s567 = sld [smem:[#allocation8 + %s546]]
      %s568 = sshrl.u32 %s567, 3
      %s569 = sand.u32 %s567, 7
      %s570 = smul.u32 %s568, 16
      %s571 = sadd.s32 %s569, %s570
      %s572 = scalar_lea.hbm %s3, %s571
      %s573 = scalar_lea.vmem [#allocation3], %s557
      %s574 = sshll.u32 %s572, 4
      %s575 = int_to_ptr.hbm [resolvable:$true] %s574
      %s576 = sshll.u32 %s573, 4
      %s577 = int_to_ptr.vmem [resolvable:$true] %s576
      %581 = dma.hbm_to_vmem [thread:$0]  %s575, 32, %s577, %s519, 128, 128, 1
      %s582 = sld [smem:[#allocation9 + %s546]]
      %s583 = sshrl.u32 %s582, 3
      %s584 = sand.u32 %s582, 7
      %s585 = smul.u32 %s583, 16
      %s586 = sadd.s32 %s584, %s585
      %s587 = scalar_lea.hbm %s4, %s586
      %s588 = scalar_lea.vmem [#allocation4], %s557
      %s589 = sshll.u32 %s587, 4
      %s590 = int_to_ptr.hbm [resolvable:$true] %s589
      %s591 = sshll.u32 %s588, 4
      %s592 = int_to_ptr.vmem [resolvable:$true] %s591
      %596 = dma.hbm_to_vmem [thread:$0]  %s590, 32, %s592, %s536, 128, 128, 1
      %s597 = sadd.s32 %s486, 2
      %s598 = sadd.s32 %s479, %s597
      %s599 = sld [smem:[#allocation7 + %s598]]
      %s600 = sshrl.u32 %s599, 3
      %s601 = sand.u32 %s599, 7
      %s602 = smul.u32 %s600, 16
      %s603 = sadd.s32 %s601, %s602
      %s604 = scalar_lea.hbm %s3, %s603
      %s605 = sshrl.u32 %s597, 3
      %s606 = sand.u32 %s597, 7
      %s607 = smul.u32 %s605, 16
      %s608 = sadd.s32 %s606, %s607
      %s609 = sadd.s32 %s608, %s498
      %s610 = scalar_lea.vmem [#allocation2], %s609
      %s611 = sshll.u32 %s604, 4
      %s612 = int_to_ptr.hbm [resolvable:$true] %s611
      %s613 = sshll.u32 %s610, 4
      %s614 = int_to_ptr.vmem [resolvable:$true] %s613
      %618 = dma.hbm_to_vmem [thread:$0]  %s612, 32, %s614, %s502, 128, 128, 1
      %s619 = sld [smem:[#allocation8 + %s598]]
      %s620 = sshrl.u32 %s619, 3
      %s621 = sand.u32 %s619, 7
      %s622 = smul.u32 %s620, 16
      %s623 = sadd.s32 %s621, %s622
      %s624 = scalar_lea.hbm %s3, %s623
      %s625 = scalar_lea.vmem [#allocation3], %s609
      %s626 = sshll.u32 %s624, 4
      %s627 = int_to_ptr.hbm [resolvable:$true] %s626
      %s628 = sshll.u32 %s625, 4
      %s629 = int_to_ptr.vmem [resolvable:$true] %s628
      %633 = dma.hbm_to_vmem [thread:$0]  %s627, 32, %s629, %s519, 128, 128, 1
      %s634 = sld [smem:[#allocation9 + %s598]]
      %s635 = sshrl.u32 %s634, 3
      %s636 = sand.u32 %s634, 7
      %s637 = smul.u32 %s635, 16
      %s638 = sadd.s32 %s636, %s637
      %s639 = scalar_lea.hbm %s4, %s638
      %s640 = scalar_lea.vmem [#allocation4], %s609
      %s641 = sshll.u32 %s639, 4
      %s642 = int_to_ptr.hbm [resolvable:$true] %s641
      %s643 = sshll.u32 %s640, 4
      %s644 = int_to_ptr.vmem [resolvable:$true] %s643
      %648 = dma.hbm_to_vmem [thread:$0]  %s642, 32, %s644, %s536, 128, 128, 1
      %s649 = sadd.s32 %s486, 3
      %s650 = sadd.s32 %s479, %s649
      %s651 = sld [smem:[#allocation7 + %s650]]
      %s652 = sshrl.u32 %s651, 3
      %s653 = sand.u32 %s651, 7
      %s654 = smul.u32 %s652, 16
      %s655 = sadd.s32 %s653, %s654
      %s656 = scalar_lea.hbm %s3, %s655
      %s657 = sshrl.u32 %s649, 3
      %s658 = sand.u32 %s649, 7
      %s659 = smul.u32 %s657, 16
      %s660 = sadd.s32 %s658, %s659
      %s661 = sadd.s32 %s660, %s498
      %s662 = scalar_lea.vmem [#allocation2], %s661
      %s663 = sshll.u32 %s656, 4
      %s664 = int_to_ptr.hbm [resolvable:$true] %s663
      %s665 = sshll.u32 %s662, 4
      %s666 = int_to_ptr.vmem [resolvable:$true] %s665
      %670 = dma.hbm_to_vmem [thread:$0]  %s664, 32, %s666, %s502, 128, 128, 1
      %s671 = sld [smem:[#allocation8 + %s650]]
      %s672 = sshrl.u32 %s671, 3
      %s673 = sand.u32 %s671, 7
      %s674 = smul.u32 %s672, 16
      %s675 = sadd.s32 %s673, %s674
      %s676 = scalar_lea.hbm %s3, %s675
      %s677 = scalar_lea.vmem [#allocation3], %s661
      %s678 = sshll.u32 %s676, 4
      %s679 = int_to_ptr.hbm [resolvable:$true] %s678
      %s680 = sshll.u32 %s677, 4
      %s681 = int_to_ptr.vmem [resolvable:$true] %s680
      %685 = dma.hbm_to_vmem [thread:$0]  %s679, 32, %s681, %s519, 128, 128, 1
      %s686 = sld [smem:[#allocation9 + %s650]]
      %s687 = sshrl.u32 %s686, 3
      %s688 = sand.u32 %s686, 7
      %s689 = smul.u32 %s687, 16
      %s690 = sadd.s32 %s688, %s689
      %s691 = scalar_lea.hbm %s4, %s690
      %s692 = scalar_lea.vmem [#allocation4], %s661
      %s693 = sshll.u32 %s691, 4
      %s694 = int_to_ptr.hbm [resolvable:$true] %s693
      %s695 = sshll.u32 %s692, 4
      %s696 = int_to_ptr.vmem [resolvable:$true] %s695
      %700 = dma.hbm_to_vmem [thread:$0]  %s694, 32, %s696, %s536, 128, 128, 1
      %s701 = sadd.s32 %s486, 4
      %s702 = sadd.s32 %s479, %s701
      %s703 = sld [smem:[#allocation7 + %s702]]
      %s704 = sshrl.u32 %s703, 3
      %s705 = sand.u32 %s703, 7
      %s706 = smul.u32 %s704, 16
      %s707 = sadd.s32 %s705, %s706
      %s708 = scalar_lea.hbm %s3, %s707
      %s709 = sshrl.u32 %s701, 3
      %s710 = sand.u32 %s701, 7
      %s711 = smul.u32 %s709, 16
      %s712 = sadd.s32 %s710, %s711
      %s713 = sadd.s32 %s712, %s498
      %s714 = scalar_lea.vmem [#allocation2], %s713
      %s715 = sshll.u32 %s708, 4
      %s716 = int_to_ptr.hbm [resolvable:$true] %s715
      %s717 = sshll.u32 %s714, 4
      %s718 = int_to_ptr.vmem [resolvable:$true] %s717
      %722 = dma.hbm_to_vmem [thread:$0]  %s716, 32, %s718, %s502, 128, 128, 1
      %s723 = sld [smem:[#allocation8 + %s702]]
      %s724 = sshrl.u32 %s723, 3
      %s725 = sand.u32 %s723, 7
      %s726 = smul.u32 %s724, 16
      %s727 = sadd.s32 %s725, %s726
      %s728 = scalar_lea.hbm %s3, %s727
      %s729 = scalar_lea.vmem [#allocation3], %s713
      %s730 = sshll.u32 %s728, 4
      %s731 = int_to_ptr.hbm [resolvable:$true] %s730
      %s732 = sshll.u32 %s729, 4
      %s733 = int_to_ptr.vmem [resolvable:$true] %s732
      %737 = dma.hbm_to_vmem [thread:$0]  %s731, 32, %s733, %s519, 128, 128, 1
      %s738 = sld [smem:[#allocation9 + %s702]]
      %s739 = sshrl.u32 %s738, 3
      %s740 = sand.u32 %s738, 7
      %s741 = smul.u32 %s739, 16
      %s742 = sadd.s32 %s740, %s741
      %s743 = scalar_lea.hbm %s4, %s742
      %s744 = scalar_lea.vmem [#allocation4], %s713
      %s745 = sshll.u32 %s743, 4
      %s746 = int_to_ptr.hbm [resolvable:$true] %s745
      %s747 = sshll.u32 %s744, 4
      %s748 = int_to_ptr.vmem [resolvable:$true] %s747
      %752 = dma.hbm_to_vmem [thread:$0]  %s746, 32, %s748, %s536, 128, 128, 1
      %s753 = sadd.s32 %s486, 5
      %s754 = sadd.s32 %s479, %s753
      %s755 = sld [smem:[#allocation7 + %s754]]
      %s756 = sshrl.u32 %s755, 3
      %s757 = sand.u32 %s755, 7
      %s758 = smul.u32 %s756, 16
      %s759 = sadd.s32 %s757, %s758
      %s760 = scalar_lea.hbm %s3, %s759
      %s761 = sshrl.u32 %s753, 3
      %s762 = sand.u32 %s753, 7
      %s763 = smul.u32 %s761, 16
      %s764 = sadd.s32 %s762, %s763
      %s765 = sadd.s32 %s764, %s498
      %s766 = scalar_lea.vmem [#allocation2], %s765
      %s767 = sshll.u32 %s760, 4
      %s768 = int_to_ptr.hbm [resolvable:$true] %s767
      %s769 = sshll.u32 %s766, 4
      %s770 = int_to_ptr.vmem [resolvable:$true] %s769
      %774 = dma.hbm_to_vmem [thread:$0]  %s768, 32, %s770, %s502, 128, 128, 1
      %s775 = sld [smem:[#allocation8 + %s754]]
      %s776 = sshrl.u32 %s775, 3
      %s777 = sand.u32 %s775, 7
      %s778 = smul.u32 %s776, 16
      %s779 = sadd.s32 %s777, %s778
      %s780 = scalar_lea.hbm %s3, %s779
      %s781 = scalar_lea.vmem [#allocation3], %s765
      %s782 = sshll.u32 %s780, 4
      %s783 = int_to_ptr.hbm [resolvable:$true] %s782
      %s784 = sshll.u32 %s781, 4
      %s785 = int_to_ptr.vmem [resolvable:$true] %s784
      %789 = dma.hbm_to_vmem [thread:$0]  %s783, 32, %s785, %s519, 128, 128, 1
      %s790 = sld [smem:[#allocation9 + %s754]]
      %s791 = sshrl.u32 %s790, 3
      %s792 = sand.u32 %s790, 7
      %s793 = smul.u32 %s791, 16
      %s794 = sadd.s32 %s792, %s793
      %s795 = scalar_lea.hbm %s4, %s794
      %s796 = scalar_lea.vmem [#allocation4], %s765
      %s797 = sshll.u32 %s795, 4
      %s798 = int_to_ptr.hbm [resolvable:$true] %s797
      %s799 = sshll.u32 %s796, 4
      %s800 = int_to_ptr.vmem [resolvable:$true] %s799
      %804 = dma.hbm_to_vmem [thread:$0]  %s798, 32, %s800, %s536, 128, 128, 1
      %s805 = sadd.s32 %s486, 6
      %s806 = sadd.s32 %s479, %s805
      %s807 = sld [smem:[#allocation7 + %s806]]
      %s808 = sshrl.u32 %s807, 3
      %s809 = sand.u32 %s807, 7
      %s810 = smul.u32 %s808, 16
      %s811 = sadd.s32 %s809, %s810
      %s812 = scalar_lea.hbm %s3, %s811
      %s813 = sshrl.u32 %s805, 3
      %s814 = sand.u32 %s805, 7
      %s815 = smul.u32 %s813, 16
      %s816 = sadd.s32 %s814, %s815
      %s817 = sadd.s32 %s816, %s498
      %s818 = scalar_lea.vmem [#allocation2], %s817
      %s819 = sshll.u32 %s812, 4
      %s820 = int_to_ptr.hbm [resolvable:$true] %s819
      %s821 = sshll.u32 %s818, 4
      %s822 = int_to_ptr.vmem [resolvable:$true] %s821
      %826 = dma.hbm_to_vmem [thread:$0]  %s820, 32, %s822, %s502, 128, 128, 1
      %s827 = sld [smem:[#allocation8 + %s806]]
      %s828 = sshrl.u32 %s827, 3
      %s829 = sand.u32 %s827, 7
      %s830 = smul.u32 %s828, 16
      %s831 = sadd.s32 %s829, %s830
      %s832 = scalar_lea.hbm %s3, %s831
      %s833 = scalar_lea.vmem [#allocation3], %s817
      %s834 = sshll.u32 %s832, 4
      %s835 = int_to_ptr.hbm [resolvable:$true] %s834
      %s836 = sshll.u32 %s833, 4
      %s837 = int_to_ptr.vmem [resolvable:$true] %s836
      %841 = dma.hbm_to_vmem [thread:$0]  %s835, 32, %s837, %s519, 128, 128, 1
      %s842 = sld [smem:[#allocation9 + %s806]]
      %s843 = sshrl.u32 %s842, 3
      %s844 = sand.u32 %s842, 7
      %s845 = smul.u32 %s843, 16
      %s846 = sadd.s32 %s844, %s845
      %s847 = scalar_lea.hbm %s4, %s846
      %s848 = scalar_lea.vmem [#allocation4], %s817
      %s849 = sshll.u32 %s847, 4
      %s850 = int_to_ptr.hbm [resolvable:$true] %s849
      %s851 = sshll.u32 %s848, 4
      %s852 = int_to_ptr.vmem [resolvable:$true] %s851
      %856 = dma.hbm_to_vmem [thread:$0]  %s850, 32, %s852, %s536, 128, 128, 1
      %s857 = sadd.s32 %s486, 7
      %s858 = sadd.s32 %s479, %s857
      %s859 = sld [smem:[#allocation7 + %s858]]
      %s860 = sshrl.u32 %s859, 3
      %s861 = sand.u32 %s859, 7
      %s862 = smul.u32 %s860, 16
      %s863 = sadd.s32 %s861, %s862
      %s864 = scalar_lea.hbm %s3, %s863
      %s865 = sshrl.u32 %s857, 3
      %s866 = sand.u32 %s857, 7
      %s867 = smul.u32 %s865, 16
      %s868 = sadd.s32 %s866, %s867
      %s869 = sadd.s32 %s868, %s498
      %s870 = scalar_lea.vmem [#allocation2], %s869
      %s871 = sshll.u32 %s864, 4
      %s872 = int_to_ptr.hbm [resolvable:$true] %s871
      %s873 = sshll.u32 %s870, 4
      %s874 = int_to_ptr.vmem [resolvable:$true] %s873
      %878 = dma.hbm_to_vmem [thread:$0]  %s872, 32, %s874, %s502, 128, 128, 1
      %s879 = sld [smem:[#allocation8 + %s858]]
      %s880 = sshrl.u32 %s879, 3
      %s881 = sand.u32 %s879, 7
      %s882 = smul.u32 %s880, 16
      %s883 = sadd.s32 %s881, %s882
      %s884 = scalar_lea.hbm %s3, %s883
      %s885 = scalar_lea.vmem [#allocation3], %s869
      %s886 = sshll.u32 %s884, 4
      %s887 = int_to_ptr.hbm [resolvable:$true] %s886
      %s888 = sshll.u32 %s885, 4
      %s889 = int_to_ptr.vmem [resolvable:$true] %s888
      %893 = dma.hbm_to_vmem [thread:$0]  %s887, 32, %s889, %s519, 128, 128, 1
      %s894 = sld [smem:[#allocation9 + %s858]]
      %s895 = sshrl.u32 %s894, 3
      %s896 = sand.u32 %s894, 7
      %s897 = smul.u32 %s895, 16
      %s898 = sadd.s32 %s896, %s897
      %s899 = scalar_lea.hbm %s4, %s898
      %s900 = scalar_lea.vmem [#allocation4], %s869
      %s901 = sshll.u32 %s899, 4
      %s902 = int_to_ptr.hbm [resolvable:$true] %s901
      %s903 = sshll.u32 %s900, 4
      %s904 = int_to_ptr.vmem [resolvable:$true] %s903
      %908 = dma.hbm_to_vmem [thread:$0]  %s902, 32, %s904, %s536, 128, 128, 1
    $region21: #{tpu_custom_call.1} parent=15 // loop_footer
      %s485 = sadd.s32 1, %s481
    $region22: #{tpu_custom_call.1} parent=15 // loop_footer_branch
      %480 = sbr.rel target = $region18
    $region23: #{tpu_custom_call.1} parent=15 // loop_exit
      _
  $region16: #{tpu_custom_call.1} parent=0 // pred_fallthru
    _
  %s909 = smul.u32 %s49, 6
  %s910 = smul.addr %s909, 8
  %s911 = scalar_lea.vmem [#allocation2], %s910
  %s912 = smul.u32 %s49, 3
  %s913 = scalar_lea.sflag [#allocation5], %s912
  %s914 = smul.u32 8, 3
  %s915 = smul.u32 %s914, 2
  %s916 = sshll.u32 %s915, 4
  %917 = dma.done %s913, %s916
  %s918 = smul.addr %s909, 8
  %s919 = scalar_lea.vmem [#allocation3], %s918
  %s920 = sadd.s32 1, %s912
  %s921 = scalar_lea.sflag [#allocation5], %s920
  %s922 = sshll.u32 %s915, 4
  %923 = dma.done %s921, %s922
  %s924 = smul.addr %s909, 8
  %s925 = scalar_lea.vmem [#allocation4], %s924
  %s926 = sadd.s32 2, %s912
  %s927 = scalar_lea.sflag [#allocation5], %s926
  %s928 = sshll.u32 %s915, 4
  %929 = dma.done %s927, %s928
  %v930 = vld [vmem:[%s911] sm:$0xff]
  %v931 = vld [vmem:[%s911 + $0x8] sm:$0xff]
  %v932 = vld [vmem:[%s911 + $0x10] sm:$0xff]
  %v933 = vld [vmem:[%s911 + $0x18] sm:$0xff]
  %v934 = vld [vmem:[%s911 + $0x20] sm:$0xff]
  %v935 = vld [vmem:[%s911 + $0x28] sm:$0xff]
  %v936 = vld [vmem:[%s919] sm:$0xff]
  %v937 = vld [vmem:[%s919 + $0x8] sm:$0xff]
  %v938 = vld [vmem:[%s919 + $0x10] sm:$0xff]
  %v939 = vld [vmem:[%s919 + $0x18] sm:$0xff]
  %v940 = vld [vmem:[%s919 + $0x20] sm:$0xff]
  %v941 = vld [vmem:[%s919 + $0x28] sm:$0xff]
  %v942 = vld [vmem:[%s925] sm:$0xff]
  %v943 = vld [vmem:[%s925 + $0x8] sm:$0xff]
  %v944 = vld [vmem:[%s925 + $0x10] sm:$0xff]
  %v945 = vld [vmem:[%s925 + $0x18] sm:$0xff]
  %v946 = vld [vmem:[%s925 + $0x20] sm:$0xff]
  %v947 = vld [vmem:[%s925 + $0x28] sm:$0xff]
  %v948 = vmul.f32 %v930, %v942
  %v949 = vmul.f32 %v932, %v944
  %v950 = vmul.f32 %v934, %v946
  %v951 = vmul.f32 %v931, %v943
  %v952 = vmul.f32 %v933, %v945
  %v953 = vmul.f32 %v935, %v947
  %v954 = vsub.f32 %v948, %v951
  %v955 = vsub.f32 %v949, %v952
  %v956 = vsub.f32 %v950, %v953
  %v957 = vsub.f32 %v954, %v936
  %v958 = vsub.f32 %v955, %v938
  %v959 = vsub.f32 %v956, %v940
  %v960 = vmul.f32 %v930, %v943
  %v961 = vmul.f32 %v932, %v945
  %v962 = vmul.f32 %v934, %v947
  %v963 = vmul.f32 %v931, %v942
  %v964 = vmul.f32 %v933, %v944
  %v965 = vmul.f32 %v935, %v946
  %v966 = vadd.f32 %v960, %v963
  %v967 = vadd.f32 %v961, %v964
  %v968 = vadd.f32 %v962, %v965
  %v969 = vsub.f32 %v966, %v937
  %v970 = vsub.f32 %v967, %v939
  %v971 = vsub.f32 %v968, %v941
  %v972 = vmul.f32 %v957, %v957
  %v973 = vmul.f32 %v958, %v958
  %v974 = vmul.f32 %v959, %v959
  %v975 = vmul.f32 %v969, %v969
  %v976 = vmul.f32 %v970, %v970
  %v977 = vmul.f32 %v971, %v971
  %v978 = vadd.f32 %v972, %v975
  %v979 = vadd.f32 %v973, %v976
  %v980 = vadd.f32 %v974, %v977
  %v981 = vrsqrt.pop %v978
  %v982 = vmul.f32 %v981, %v978
  %v983 = vmul.f32 %v982, %v981
  %v984 = vmul.f32 0.5, %v983
  %v985 = vsub.f32 1.5, %v984
  %v986 = vmul.f32 %v981, %v985
  %v987 = vmul.f32 %v978, %v986
  %vm988 = vcmp.eq.f32.partialorder %v978, inf
  %v989 = vsel %vm988, %v978, %v987
  %vm990 = vcmp.eq.f32.partialorder %v978, 0.0
  %v991 = vand.u32 %v978, 2147483648
  %v992 = vsel %vm990, %v991, %v989
  %v993 = vrsqrt.pop %v979
  %v994 = vmul.f32 %v993, %v979
  %v995 = vmul.f32 %v994, %v993
  %v996 = vmul.f32 0.5, %v995
  %v997 = vsub.f32 1.5, %v996
  %v998 = vmul.f32 %v993, %v997
  %v999 = vmul.f32 %v979, %v998
  %vm1000 = vcmp.eq.f32.partialorder %v979, inf
  %v1001 = vsel %vm1000, %v979, %v999
  %vm1002 = vcmp.eq.f32.partialorder %v979, 0.0
  %v1003 = vand.u32 %v979, 2147483648
  %v1004 = vsel %vm1002, %v1003, %v1001
  %v1005 = vrsqrt.pop %v980
  %v1006 = vmul.f32 %v1005, %v980
  %v1007 = vmul.f32 %v1006, %v1005
  %v1008 = vmul.f32 0.5, %v1007
  %v1009 = vsub.f32 1.5, %v1008
  %v1010 = vmul.f32 %v1005, %v1009
  %v1011 = vmul.f32 %v980, %v1010
  %vm1012 = vcmp.eq.f32.partialorder %v980, inf
  %v1013 = vsel %vm1012, %v980, %v1011
  %vm1014 = vcmp.eq.f32.partialorder %v980, 0.0
  %v1015 = vand.u32 %v980, 2147483648
  %v1016 = vsel %vm1014, %v1015, %v1013
  %1017 = vadd.xlane.f32.xlu0 %v992
  %v1018 = vpop.xlane.xlu0 %1017
  %1019 = vadd.xlane.f32.xlu0 %v1004
  %v1020 = vpop.xlane.xlu0 %1019
  %1021 = vadd.xlane.f32.xlu0 %v1016
  %v1022 = vpop.xlane.xlu0 %1021
  %v1023 = vsub.f32 12.0, %v1018
  %v1024 = vsub.f32 12.0, %v1020
  %v1025 = vsub.f32 12.0, %v1022
  %v1026 = vxor.u32 %v1023, 2147483648
  %v1027 = vxor.u32 %v1024, 2147483648
  %v1028 = vxor.u32 %v1025, 2147483648
  %v1029 = vmul.f32 %v1026, 1.442695
  %v1030 = vpow.pop %v1029
  %v1031 = vmul.f32 %v1027, 1.442695
  %v1032 = vpow.pop %v1031
  %v1033 = vmul.f32 %v1028, 1.442695
  %v1034 = vpow.pop %v1033
  %v1035 = vadd.f32 %v1030, 1.0
  %v1036 = vadd.f32 %v1032, 1.0
  %v1037 = vadd.f32 %v1034, 1.0
  %v1038 = vrcp.pop %v1035
  %v1039 = vmul.f32 %v1035, %v1038
  %v1040 = vsub.f32 1.0, %v1039
  %v1041 = vmul.f32 %v1038, %v1040
  %v1042 = vadd.f32 %v1038, %v1041
  %vm1043 = vweird.f32 %v1035
  %vm1044 = vweird.f32 %v1038
  %vm1045 = vmor %vm1043, %vm1044
  %v1046 = vsel %vm1045, %v1038, %v1042
  %v1047 = vand.u32 2147483647, %v1035
  %vm1048 = vcmp.eq.f32.partialorder %v1047, 8.507059e+37
  %v1049 = vand.u32 %v1035, 2147483648
  %v1050 = vor.u32 1.1754944e-38, %v1049
  %v1051 = vsel %vm1048, %v1050, %v1046
  %v1052 = vmul.f32 1.0, %v1051
  %v1053 = vrcp.pop %v1036
  %v1054 = vmul.f32 %v1036, %v1053
  %v1055 = vsub.f32 1.0, %v1054
  %v1056 = vmul.f32 %v1053, %v1055
  %v1057 = vadd.f32 %v1053, %v1056
  %vm1058 = vweird.f32 %v1036
  %vm1059 = vweird.f32 %v1053
  %vm1060 = vmor %vm1058, %vm1059
  %v1061 = vsel %vm1060, %v1053, %v1057
  %v1062 = vand.u32 2147483647, %v1036
  %vm1063 = vcmp.eq.f32.partialorder %v1062, 8.507059e+37
  %v1064 = vand.u32 %v1036, 2147483648
  %v1065 = vor.u32 1.1754944e-38, %v1064
  %v1066 = vsel %vm1063, %v1065, %v1061
  %v1067 = vmul.f32 1.0, %v1066
  %v1068 = vrcp.pop %v1037
  %v1069 = vmul.f32 %v1037, %v1068
  %v1070 = vsub.f32 1.0, %v1069
  %v1071 = vmul.f32 %v1068, %v1070
  %v1072 = vadd.f32 %v1068, %v1071
  %vm1073 = vweird.f32 %v1037
  %vm1074 = vweird.f32 %v1068
  %vm1075 = vmor %vm1073, %vm1074
  %v1076 = vsel %vm1075, %v1068, %v1072
  %v1077 = vand.u32 2147483647, %v1037
  %vm1078 = vcmp.eq.f32.partialorder %v1077, 8.507059e+37
  %v1079 = vand.u32 %v1037, 2147483648
  %v1080 = vor.u32 1.1754944e-38, %v1079
  %v1081 = vsel %vm1078, %v1080, %v1076
  %v1082 = vmul.f32 1.0, %v1081
  %vm1083 = vcmask 7168
  %1084 = vst.msk [vmem:[%s39] sm:$0xff] %vm1083, %v1052
  %1085 = vst.msk [vmem:[%s39 + $0x8] sm:$0xff] %vm1083, %v1067
  %1086 = vst.msk [vmem:[%s39 + $0x10] sm:$0xff] %vm1083, %v1082
  %s1087 = sadd.s32 0, 0
  %s1088 = smul.u32 3, %s1087
  %p1089 = scmp.lt.s32.totalorder %s1088, 2
  %s1090 = scalar_select %p1089, %s1088, 2
  %s1091 = smul.addr %s1090, 8
  %s1092 = scalar_lea.vmem %s5, %s1091
  // Predicated region
  $region24: #{tpu_custom_call.1} parent=0 // pred_check
    _
  $region25: #{tpu_custom_call.1} parent=0 // pred_check_branch
    %1094 = sbr.rel (0) target = $region27
  $region26: #{tpu_custom_call.1} parent=0 // pred_region
    %s1095 = sadd.s32 0, 0
    %s1096 = smul.u32 3, %s1095
  $region27: #{tpu_custom_call.1} parent=0 // pred_fallthru
    _
  // Predicated region
  $region28: #{tpu_custom_call.1} parent=0 // pred_check
    _
  $region29: #{tpu_custom_call.1} parent=0 // pred_check_branch
    %1098 = sbr.rel (0) target = $region31
  $region30: #{tpu_custom_call.1} parent=0 // pred_region
    %s1099 = sadd.s32 0, 0
    %s1100 = smul.u32 3, %s1099
    %p1101 = scmp.lt.s32.totalorder %s1100, 2
    %s1102 = scalar_select %p1101, %s1100, 2
    %s1103 = smul.addr %s1102, 8
    %s1104 = scalar_lea.vmem %s5, %s1103
  $region31: #{tpu_custom_call.1} parent=0 // pred_fallthru
    _
  %1105 = vsyncmov [#allocation5]
  %s1106 = vpop.sfrf %1105
  %p1107 = scmp.eq.s32.totalorder %s1106, 0
  %p1108 = pneg %p1107
  %1110 = shalt.err (%p1108)
  %s1111 = scalar_lea.sflag [#allocation5], 1
  %1112 = vsyncmov %s1111
  %s1113 = vpop.sfrf %1112
  %p1114 = scmp.eq.s32.totalorder %s1113, 0
  %p1115 = pneg %p1114
  %1117 = shalt.err (%p1115)
  %s1118 = scalar_lea.sflag [#allocation5], 2
  %1119 = vsyncmov %s1118
  %s1120 = vpop.sfrf %1119
  %p1121 = scmp.eq.s32.totalorder %s1120, 0
  %p1122 = pneg %p1121
  %1124 = shalt.err (%p1122)
  %s1125 = scalar_lea.sflag [#allocation5], 3
  %1126 = vsyncmov %s1125
  %s1127 = vpop.sfrf %1126
  %p1128 = scmp.eq.s32.totalorder %s1127, 0
  %p1129 = pneg %p1128
  %1131 = shalt.err (%p1129)
  %s1132 = scalar_lea.sflag [#allocation5], 4
  %1133 = vsyncmov %s1132
  %s1134 = vpop.sfrf %1133
  %p1135 = scmp.eq.s32.totalorder %s1134, 0
  %p1136 = pneg %p1135
  %1138 = shalt.err (%p1136)
  %s1139 = scalar_lea.sflag [#allocation5], 5
  %1140 = vsyncmov %s1139
  %s1141 = vpop.sfrf %1140
  %p1142 = scmp.eq.s32.totalorder %s1141, 0
  %p1143 = pneg %p1142
  %1145 = shalt.err (%p1143)

</llo_original>
